<compile_context>
chip_gen: v5e
topology: v5e:2x2
jax: 0.10.0
libtpu: 0.0.40
codegen_flags: <defaults>
</compile_context>

<pallas_src>
import numpy as np
import jax
import jax.numpy as jnp
from jax.experimental import pallas as pl
from jax.experimental.pallas import tpu as pltpu

# ----------------------------- model hyper-parameters -----------------------------
WINDOW_SIZE = 3
ENTITY_DIM = 4
STATIC_SPARSE_DIMS = [5, 7]
STATIC_DENSE_DIMS = 3
DYNAMIC_SPARSE_DIMS = [6, 4]
DYNAMIC_DENSE_DIMS = 3
STATIC_FEAT_DIM = len(STATIC_SPARSE_DIMS) * ENTITY_DIM + STATIC_DENSE_DIMS          # 11
DYNAMIC_FEAT_DIM = len(DYNAMIC_SPARSE_DIMS) * ENTITY_DIM + DYNAMIC_DENSE_DIMS       # 11
GNN_LAYERS = [DYNAMIC_FEAT_DIM + STATIC_FEAT_DIM, 16, 16]                            # [22, 16, 16]
RNN_IN_DIM = GNN_LAYERS[-1]                                                          # 16
RNN_HIDDEN_DIM = 8
N_NODES = 16
N_EDGES = 24

VMEM = pltpu.MemorySpace.VMEM


# ----------------------------------- kernels --------------------------------------
def _temgnn_level_kernel(level_t_ref,            # SMEM scalar prefetch: valid T per level
                         dynx_ref, adj_ref, w0_ref, b0_ref, wg_ref, bg_ref,
                         whh_ref, rnnb_ref, attw_ref, attb_ref, o_ref):
    L = pl.program_id(0)
    t_valid = level_t_ref[L]                     # number of valid timesteps at this level
    t_max = dynx_ref.shape[0]
    n = dynx_ref.shape[1]
    h_dim = whh_ref.shape[1]

    # --- per-timestep GNN encoder + folded RNN input projection (independent of h) ---
    #   layer0: relu(A @ (X @ W0) + b0)
    #   layer1 folded with RNN Wih: pre = A @ (H0 @ (W1 @ Wih)) + b1 @ Wih
    pre = []
    for t in range(t_max):                       # static unroll, t_max == 3
        x = dynx_ref[t]                          # [N, D_in]
        a = adj_ref[t]                           # [N, N]
        h0 = jnp.maximum(
            jnp.dot(a, jnp.dot(x, w0_ref[t], preferred_element_type=jnp.float32),
                    preferred_element_type=jnp.float32) + b0_ref[t], 0.0)
        pre.append(
            jnp.dot(a, jnp.dot(h0, wg_ref[t], preferred_element_type=jnp.float32),
                    preferred_element_type=jnp.float32) + bg_ref[t])          # [N, H]

    # --- tanh RNN recurrence: only [N,H]@[H,H] + tanh on the serial chain -----------
    whh = whh_ref[...]
    rb = rnnb_ref[...]
    h = jnp.zeros((n, h_dim), jnp.float32)
    h_seq = []
    for t in range(t_max):
        h = jnp.tanh(pre[t] + jnp.dot(h, whh, preferred_element_type=jnp.float32) + rb)
        h_seq.append(h)

    # --- masked attention pool over timesteps (single matmul for all logits) --------
    e_all = jnp.tanh(jnp.concatenate(h_seq, axis=0))                          # [T*N, H]
    logits = jnp.dot(e_all, attw_ref[...],
                     preferred_element_type=jnp.float32) + attb_ref[...]      # [T*N, 1]
    row = jax.lax.broadcasted_iota(jnp.int32, (t_max * n, 1), 0)
    logits = jnp.where(row < t_valid * n, logits, jnp.full_like(logits, -1e30))

    cols = [logits[t * n:(t + 1) * n, :] for t in range(t_max)]               # [N, 1] each
    m = cols[0]
    for c in cols[1:]:
        m = jnp.maximum(m, c)
    ps = [jnp.exp(c - m) for c in cols]
    denom = ps[0]
    for pterm in ps[1:]:
        denom = denom + pterm
    inv = 1.0 / denom
    acc = (ps[0] * inv) * h_seq[0]
    for t in range(1, t_max):
        acc = acc + (ps[t] * inv) * h_seq[t]
    o_ref[...] = acc                                                          # [N, H]


def _attn_pool_kernel(e_ref, w_ref, b_ref, o_ref):
    # e: [T, N, H], w: [H, 1], b: [1, 1] -> softmax over T, weighted sum -> [N, H]
    t_max, n, _ = e_ref.shape
    h_list = [e_ref[t] for t in range(t_max)]
    e_all = jnp.tanh(jnp.concatenate(h_list, axis=0))
    logits = jnp.dot(e_all, w_ref[...], preferred_element_type=jnp.float32) + b_ref[...]
    cols = [logits[t * n:(t + 1) * n, :] for t in range(t_max)]
    m = cols[0]
    for c in cols[1:]:
        m = jnp.maximum(m, c)
    ps = [jnp.exp(c - m) for c in cols]
    denom = ps[0]
    for pterm in ps[1:]:
        denom = denom + pterm
    inv = 1.0 / denom
    acc = (ps[0] * inv) * h_list[0]
    for t in range(1, t_max):
        acc = acc + (ps[t] * inv) * h_list[t]
    o_ref[...] = acc


# ----------------------------- host-side graph glue -------------------------------
def build_norm_adj(edge, weight, n):
    """Dense weighted adjacency (dst <- src), + self loops, row-normalized."""
    edge = np.asarray(edge)
    e = edge.shape[1]
    if weight is not None and np.asarray(weight).shape[0] == e:
        w = np.asarray(weight, dtype=np.float32)
    else:
        # TODO(synk): reference keeps weights[i+1] after torch.unique edge dedup, so counts
        # can mismatch at deeper pyramid levels (GNN internals unspecified); fall back to
        # unit weights there, matching the previous implementation.
        w = np.ones((e,), dtype=np.float32)
    adj = np.zeros((n, n), dtype=np.float32)
    src, dst = edge[0], edge[1]
    np.add.at(adj, (dst, src), w)
    adj += np.eye(n, dtype=np.float32)
    deg = adj.sum(axis=1, keepdims=True)
    return adj / np.maximum(deg, 1e-6)


def prepare_adjacency(edges, weights, n, window):
    """All pyramid levels' row-normalized adjacencies, padded to [window, window, n, n]."""
    # TODO(synk): torch.unique(edge, dim=1) is data-dependent-sized; done host-side in numpy.
    edges = [np.asarray(e) for e in edges]
    weights = [np.asarray(w) for w in weights]
    adj_all = np.tile(np.eye(n, dtype=np.float32), (window, window, 1, 1))
    for lvl in range(window):
        for t in range(len(edges)):
            adj_all[lvl, t] = build_norm_adj(edges[t], weights[t], n)
        if lvl < window - 1:                       # combine_edges (edges/weights part)
            new_edges, new_w = [], []
            for i in range(len(edges) - 1):
                e = np.unique(np.concatenate(edges[i:i + 2], axis=1), axis=1)
                new_edges.append(e)
                new_w.append(weights[i + 1])       # mirrors reference combine_edges
            edges, weights = new_edges, new_w
    return jnp.asarray(adj_all)


# ------------------------------- parameter init ------------------------------------
def init_linear(key, in_dim, out_dim):
    kw, kb = jax.random.split(key)
    bound = 1.0 / np.sqrt(in_dim)
    w = jax.random.uniform(kw, (in_dim, out_dim), jnp.float32, -bound, bound)
    b = jax.random.uniform(kb, (out_dim,), jnp.float32, -bound, bound)
    return w, b


def init_temgnn_params(key, window_size):
    keys = iter(jax.random.split(key, 64))
    p = {}
    p["static_embeds"] = [0.1 * jax.random.normal(next(keys), (d, ENTITY_DIM), jnp.float32)
                          for d in STATIC_SPARSE_DIMS]
    p["dynamic_embeds"] = [0.1 * jax.random.normal(next(keys), (d, ENTITY_DIM), jnp.float32)
                           for d in DYNAMIC_SPARSE_DIMS]
    p["gnn"] = []
    for _ in range(window_size):
        enc = [init_linear(next(keys), GNN_LAYERS[li], GNN_LAYERS[li + 1])
               for li in range(len(GNN_LAYERS) - 1)]
        p["gnn"].append(enc)
    wih, bih = init_linear(next(keys), RNN_IN_DIM, RNN_HIDDEN_DIM)
    whh, bhh = init_linear(next(keys), RNN_HIDDEN_DIM, RNN_HIDDEN_DIM)
    p["rnn"] = (wih, whh, bih + bhh)
    aw, ab = init_linear(next(keys), RNN_HIDDEN_DIM, 1)
    p["att_w"] = aw                    # [H, 1]
    p["att_b"] = ab.reshape(1, 1)
    return p


def init_pyramid_params(key):
    keys = jax.random.split(key, WINDOW_SIZE + 1)
    p = {"gnn1": [init_temgnn_params(keys[i], WINDOW_SIZE - i) for i in range(WINDOW_SIZE)]}
    aw, ab = init_linear(keys[-1], RNN_HIDDEN_DIM, 1)
    p["att_w1"] = aw
    p["att_b1"] = ab.reshape(1, 1)
    return p


def pack_pyramid_params(p):
    """Stack per-level / per-timestep params into padded arrays; fold W1 @ Wih on host."""
    n_lvl = len(p["gnn1"])
    t_max = WINDOW_SIZE
    d_in, d_h = GNN_LAYERS[0], GNN_LAYERS[1]
    h_dim = RNN_HIDDEN_DIM
    w0 = np.zeros((n_lvl, t_max, d_in, d_h), np.float32)
    b0 = np.zeros((n_lvl, t_max, 1, d_h), np.float32)
    wg = np.zeros((n_lvl, t_max, d_h, h_dim), np.float32)
    bg = np.zeros((n_lvl, t_max, 1, h_dim), np.float32)
    whh = np.zeros((n_lvl, h_dim, h_dim), np.float32)
    rnn_b = np.zeros((n_lvl, 1, h_dim), np.float32)
    att_w = np.zeros((n_lvl, h_dim, 1), np.float32)
    att_b = np.zeros((n_lvl, 1, 1), np.float32)
    static_embeds, dynamic_embeds = [], []
    for lvl, lp in enumerate(p["gnn1"]):
        wih, whh_l, b_l = (np.asarray(a) for a in lp["rnn"])
        for t, ((w0_t, b0_t), (w1_t, b1_t)) in enumerate(lp["gnn"]):   # 2 GCN layers
            w0[lvl, t] = np.asarray(w0_t)
            b0[lvl, t, 0] = np.asarray(b0_t)
            # fold: (A @ (H0 @ W1) + b1) @ Wih == A @ (H0 @ (W1 @ Wih)) + b1 @ Wih
            wg[lvl, t] = np.asarray(w1_t) @ wih
            bg[lvl, t, 0] = np.asarray(b1_t) @ wih
        whh[lvl] = whh_l
        rnn_b[lvl, 0] = b_l
        att_w[lvl] = np.asarray(lp["att_w"])
        att_b[lvl] = np.asarray(lp["att_b"])
        static_embeds.append(list(lp["static_embeds"]))
        dynamic_embeds.append(list(lp["dynamic_embeds"]))
    return {
        "static_embeds": static_embeds, "dynamic_embeds": dynamic_embeds,
        "w0": jnp.asarray(w0), "b0": jnp.asarray(b0),
        "wg": jnp.asarray(wg), "bg": jnp.asarray(bg),
        "whh": jnp.asarray(whh), "rnn_b": jnp.asarray(rnn_b),
        "att_w": jnp.asarray(att_w), "att_b": jnp.asarray(att_b),
        "att_w1": jnp.asarray(p["att_w1"]), "att_b1": jnp.asarray(p["att_b1"]),
    }


# --------------------------------- forward pass ------------------------------------
@jax.jit
def pyramid_forward(packed, static_dense, static_sparse, dyn_dense, dyn_sparse,
                    adj_all, level_t):
    n_lvl, t_max, n, _ = adj_all.shape
    d_in = packed["w0"].shape[2]
    d_h = packed["w0"].shape[3]
    h_dim = packed["whh"].shape[1]

    # Embedding layer (XLA gathers) — each pyramid level owns its embedding tables;
    # level L, local timestep t uses global timestep L + t (combine_edges drops the head).
    dynx_levels = []
    for lvl in range(n_lvl):
        st_tabs = packed["static_embeds"][lvl]
        dy_tabs = packed["dynamic_embeds"][lvl]
        static_x = jnp.concatenate(
            [jnp.take(tbl, static_sparse[:, i], axis=0) for i, tbl in enumerate(st_tabs)]
            + [static_dense], axis=-1)
        steps = []
        for t in range(t_max):
            g = lvl + t
            if g < len(dyn_dense):
                dyn_x = jnp.concatenate(
                    [jnp.take(tbl, dyn_sparse[g][:, i], axis=0) for i, tbl in enumerate(dy_tabs)]
                    + [dyn_dense[g], static_x], axis=-1)
            else:
                dyn_x = jnp.zeros((n, d_in), jnp.float32)   # padded step (masked out later)
            steps.append(dyn_x)
        dynx_levels.append(jnp.stack(steps, axis=0))
    dynx_levels = jnp.stack(dynx_levels, axis=0)            # [n_lvl, t_max, N, D_in]

    grid_spec = pltpu.PrefetchScalarGridSpec(
        num_scalar_prefetch=1,
        grid=(n_lvl,),
        in_specs=[
            pl.BlockSpec((None, t_max, n, d_in), lambda L, lt: (L, 0, 0, 0)),     # dynx
            pl.BlockSpec((None, t_max, n, n), lambda L, lt: (L, 0, 0, 0)),        # adj
            pl.BlockSpec((None, t_max, d_in, d_h), lambda L, lt: (L, 0, 0, 0)),   # w0
            pl.BlockSpec((None, t_max, 1, d_h), lambda L, lt: (L, 0, 0, 0)),      # b0
            pl.BlockSpec((None, t_max, d_h, h_dim), lambda L, lt: (L, 0, 0, 0)),  # wg
            pl.BlockSpec((None, t_max, 1, h_dim), lambda L, lt: (L, 0, 0, 0)),    # bg
            pl.BlockSpec((None, h_dim, h_dim), lambda L, lt: (L, 0, 0)),          # whh
            pl.BlockSpec((None, 1, h_dim), lambda L, lt: (L, 0, 0)),              # rnn_b
            pl.BlockSpec((None, h_dim, 1), lambda L, lt: (L, 0, 0)),              # att_w
            pl.BlockSpec((None, 1, 1), lambda L, lt: (L, 0, 0)),                  # att_b
        ],
        out_specs=pl.BlockSpec((None, n, h_dim), lambda L, lt: (L, 0, 0)),
    )
    level_embeds = pl.pallas_call(
        _temgnn_level_kernel,
        out_shape=jax.ShapeDtypeStruct((n_lvl, n, h_dim), jnp.float32),
        grid_spec=grid_spec,
        compiler_params=pltpu.CompilerParams(dimension_semantics=("parallel",)),
    )(level_t, dynx_levels, adj_all,
      packed["w0"], packed["b0"], packed["wg"], packed["bg"],
      packed["whh"], packed["rnn_b"], packed["att_w"], packed["att_b"])

    # Final attention pool over pyramid levels.
    return pl.pallas_call(
        _attn_pool_kernel,
        out_shape=jax.ShapeDtypeStruct((n, h_dim), jnp.float32),
        in_specs=[pl.BlockSpec(memory_space=VMEM)] * 3,
        out_specs=pl.BlockSpec(memory_space=VMEM),
    )(level_embeds, packed["att_w1"], packed["att_b1"])


# ------------------------------------ main ------------------------------------------
if __name__ == "__main__":
    key = jax.random.PRNGKey(0)
    ks = jax.random.split(key, 8)

    static_dense = jax.random.normal(ks[0], (N_NODES, STATIC_DENSE_DIMS), jnp.float32)
    static_sparse = jnp.stack(
        [jax.random.randint(k, (N_NODES,), 0, d)
         for k, d in zip(jax.random.split(ks[1], len(STATIC_SPARSE_DIMS)), STATIC_SPARSE_DIMS)],
        axis=1)

    dyn_dense = tuple(
        jax.random.normal(k, (N_NODES, DYNAMIC_DENSE_DIMS), jnp.float32)
        for k in jax.random.split(ks[2], WINDOW_SIZE))
    dyn_sparse = []
    for kt in jax.random.split(ks[3], WINDOW_SIZE):
        cols = [jax.random.randint(k, (N_NODES,), 0, d)
                for k, d in zip(jax.random.split(kt, len(DYNAMIC_SPARSE_DIMS)),
                                DYNAMIC_SPARSE_DIMS)]
        dyn_sparse.append(jnp.stack(cols, axis=1))
    dyn_sparse = tuple(dyn_sparse)

    edges = [np.asarray(jax.random.randint(k, (2, N_EDGES), 0, N_NODES), dtype=np.int64)
             for k in jax.random.split(ks[4], WINDOW_SIZE)]
    weights = [np.asarray(jax.random.uniform(k, (N_EDGES,), jnp.float32, 0.1, 1.0))
               for k in jax.random.split(ks[5], WINDOW_SIZE)]

    # Host-side, once: dense row-normalized adjacencies for every pyramid level/timestep.
    adj_all = prepare_adjacency(edges, weights, N_NODES, WINDOW_SIZE)
    level_t = jnp.arange(WINDOW_SIZE, 0, -1, dtype=jnp.int32)   # valid timesteps per level

    params = init_pyramid_params(jax.random.PRNGKey(42))
    packed = pack_pyramid_params(params)

    out = pyramid_forward(packed, static_dense, static_sparse, dyn_dense, dyn_sparse,
                          adj_all, level_t)
    out = jax.block_until_ready(out)
    assert out.shape == (N_NODES, RNN_HIDDEN_DIM)
    assert bool(jnp.all(jnp.isfinite(out)))
    print("KERNEL_OK")
</pallas_src>

<mosaic_0001>
module attributes {stable_mosaic.version = 11 : i64} {
  func.func @_temgnn_level_kernel(%arg0: i32, %arg1: memref<3xi32, #tpu.memory_space<smem>>, %arg2: memref<1x3x16x22xf32, #tpu.memory_space<vmem>>, %arg3: memref<1x3x16x16xf32, #tpu.memory_space<vmem>>, %arg4: memref<1x3x22x16xf32, #tpu.memory_space<vmem>>, %arg5: memref<1x3x1x16xf32, #tpu.memory_space<vmem>>, %arg6: memref<1x3x16x8xf32, #tpu.memory_space<vmem>>, %arg7: memref<1x3x1x8xf32, #tpu.memory_space<vmem>>, %arg8: memref<1x8x8xf32, #tpu.memory_space<vmem>>, %arg9: memref<1x1x8xf32, #tpu.memory_space<vmem>>, %arg10: memref<1x8x1xf32, #tpu.memory_space<vmem>>, %arg11: memref<1x1x1xf32, #tpu.memory_space<vmem>>, %arg12: memref<1x16x8xf32, #tpu.memory_space<vmem>>) attributes {dimension_semantics = [#tpu.dimension_semantics<parallel>], iteration_bounds = array<i64: 3>, scalar_prefetch = 1 : i64, scratch_operands = 0 : i64, tpu.core_type = #tpu.core_type<tc>, window_params = [{transform_indices = @transform_0, window_bounds = array<i64: 1, 3, 16, 22>}, {transform_indices = @transform_1, window_bounds = array<i64: 1, 3, 16, 16>}, {transform_indices = @transform_2, window_bounds = array<i64: 1, 3, 22, 16>}, {transform_indices = @transform_3, window_bounds = array<i64: 1, 3, 1, 16>}, {transform_indices = @transform_4, window_bounds = array<i64: 1, 3, 16, 8>}, {transform_indices = @transform_5, window_bounds = array<i64: 1, 3, 1, 8>}, {transform_indices = @transform_6, window_bounds = array<i64: 1, 8, 8>}, {transform_indices = @transform_7, window_bounds = array<i64: 1, 1, 8>}, {transform_indices = @transform_8, window_bounds = array<i64: 1, 8, 1>}, {transform_indices = @transform_9, window_bounds = array<i64: 1, 1, 1>}, {transform_indices = @transform_10, window_bounds = array<i64: 1, 16, 8>}]} {
    %0 = arith.index_cast %arg0 : i32 to index
    %1 = memref.load %arg1[%0] : memref<3xi32, #tpu.memory_space<smem>>
    %c0 = arith.constant 0 : index
    %c0_0 = arith.constant 0 : index
    %c0_1 = arith.constant 0 : index
    %c0_2 = arith.constant 0 : index
    %2 = vector.load %arg2[%c0, %c0_0, %c0_1, %c0_2] : memref<1x3x16x22xf32, #tpu.memory_space<vmem>>, vector<1x1x16x22xf32>
    %3 = vector.shape_cast %2 : vector<1x1x16x22xf32> to vector<16x22xf32>
    %c0_3 = arith.constant 0 : index
    %c0_4 = arith.constant 0 : index
    %c0_5 = arith.constant 0 : index
    %c0_6 = arith.constant 0 : index
    %4 = vector.load %arg3[%c0_3, %c0_4, %c0_5, %c0_6] : memref<1x3x16x16xf32, #tpu.memory_space<vmem>>, vector<1x1x16x16xf32>
    %5 = vector.shape_cast %4 : vector<1x1x16x16xf32> to vector<16x16xf32>
    %c0_7 = arith.constant 0 : index
    %c0_8 = arith.constant 0 : index
    %c0_9 = arith.constant 0 : index
    %c0_10 = arith.constant 0 : index
    %6 = vector.load %arg4[%c0_7, %c0_8, %c0_9, %c0_10] : memref<1x3x22x16xf32, #tpu.memory_space<vmem>>, vector<1x1x22x16xf32>
    %7 = vector.shape_cast %6 : vector<1x1x22x16xf32> to vector<22x16xf32>
    %cst = arith.constant dense<0.000000e+00> : vector<16x16xf32>
    %8 = tpu.matmul %3, %7, %cst {dimension_numbers = #tpu.dot_dimension_numbers<[1], [0], [0], [1], [0, 0, 1, 1], [], []>} : vector<16x22xf32>, vector<22x16xf32>, vector<16x16xf32> -> vector<16x16xf32>
    %cst_11 = arith.constant dense<0.000000e+00> : vector<16x16xf32>
    %9 = tpu.matmul %5, %8, %cst_11 {dimension_numbers = #tpu.dot_dimension_numbers<[1], [0], [0], [1], [0, 0, 1, 1], [], []>} : vector<16x16xf32>, vector<16x16xf32>, vector<16x16xf32> -> vector<16x16xf32>
    %c0_12 = arith.constant 0 : index
    %c0_13 = arith.constant 0 : index
    %c0_14 = arith.constant 0 : index
    %c0_15 = arith.constant 0 : index
    %10 = vector.load %arg5[%c0_12, %c0_13, %c0_14, %c0_15] : memref<1x3x1x16xf32, #tpu.memory_space<vmem>>, vector<1x1x1x16xf32>
    %11 = vector.shape_cast %10 : vector<1x1x1x16xf32> to vector<1x16xf32>
    %12 = vector.broadcast %11 : vector<1x16xf32> to vector<16x16xf32>
    %13 = arith.addf %9, %12 : vector<16x16xf32>
    %cst_16 = arith.constant 0.000000e+00 : f32
    %14 = vector.broadcast %cst_16 : f32 to vector<16x16xf32>
    %15 = arith.maximumf %13, %14 : vector<16x16xf32>
    %c0_17 = arith.constant 0 : index
    %c0_18 = arith.constant 0 : index
    %c0_19 = arith.constant 0 : index
    %c0_20 = arith.constant 0 : index
    %16 = vector.load %arg6[%c0_17, %c0_18, %c0_19, %c0_20] : memref<1x3x16x8xf32, #tpu.memory_space<vmem>>, vector<1x1x16x8xf32>
    %17 = vector.shape_cast %16 : vector<1x1x16x8xf32> to vector<16x8xf32>
    %cst_21 = arith.constant dense<0.000000e+00> : vector<16x8xf32>
    %18 = tpu.matmul %15, %17, %cst_21 {dimension_numbers = #tpu.dot_dimension_numbers<[1], [0], [0], [1], [0, 0, 1, 1], [], []>} : vector<16x16xf32>, vector<16x8xf32>, vector<16x8xf32> -> vector<16x8xf32>
    %cst_22 = arith.constant dense<0.000000e+00> : vector<16x8xf32>
    %19 = tpu.matmul %5, %18, %cst_22 {dimension_numbers = #tpu.dot_dimension_numbers<[1], [0], [0], [1], [0, 0, 1, 1], [], []>} : vector<16x16xf32>, vector<16x8xf32>, vector<16x8xf32> -> vector<16x8xf32>
    %c0_23 = arith.constant 0 : index
    %c0_24 = arith.constant 0 : index
    %c0_25 = arith.constant 0 : index
    %c0_26 = arith.constant 0 : index
    %20 = vector.load %arg7[%c0_23, %c0_24, %c0_25, %c0_26] : memref<1x3x1x8xf32, #tpu.memory_space<vmem>>, vector<1x1x1x8xf32>
    %21 = vector.shape_cast %20 : vector<1x1x1x8xf32> to vector<1x8xf32>
    %22 = vector.broadcast %21 : vector<1x8xf32> to vector<16x8xf32>
    %23 = arith.addf %19, %22 : vector<16x8xf32>
    %c0_27 = arith.constant 0 : index
    %c1 = arith.constant 1 : index
    %c0_28 = arith.constant 0 : index
    %c0_29 = arith.constant 0 : index
    %24 = vector.load %arg2[%c0_27, %c1, %c0_28, %c0_29] : memref<1x3x16x22xf32, #tpu.memory_space<vmem>>, vector<1x1x16x22xf32>
    %25 = vector.shape_cast %24 : vector<1x1x16x22xf32> to vector<16x22xf32>
    %c0_30 = arith.constant 0 : index
    %c1_31 = arith.constant 1 : index
    %c0_32 = arith.constant 0 : index
    %c0_33 = arith.constant 0 : index
    %26 = vector.load %arg3[%c0_30, %c1_31, %c0_32, %c0_33] : memref<1x3x16x16xf32, #tpu.memory_space<vmem>>, vector<1x1x16x16xf32>
    %27 = vector.shape_cast %26 : vector<1x1x16x16xf32> to vector<16x16xf32>
    %c0_34 = arith.constant 0 : index
    %c1_35 = arith.constant 1 : index
    %c0_36 = arith.constant 0 : index
    %c0_37 = arith.constant 0 : index
    %28 = vector.load %arg4[%c0_34, %c1_35, %c0_36, %c0_37] : memref<1x3x22x16xf32, #tpu.memory_space<vmem>>, vector<1x1x22x16xf32>
    %29 = vector.shape_cast %28 : vector<1x1x22x16xf32> to vector<22x16xf32>
    %cst_38 = arith.constant dense<0.000000e+00> : vector<16x16xf32>
    %30 = tpu.matmul %25, %29, %cst_38 {dimension_numbers = #tpu.dot_dimension_numbers<[1], [0], [0], [1], [0, 0, 1, 1], [], []>} : vector<16x22xf32>, vector<22x16xf32>, vector<16x16xf32> -> vector<16x16xf32>
    %cst_39 = arith.constant dense<0.000000e+00> : vector<16x16xf32>
    %31 = tpu.matmul %27, %30, %cst_39 {dimension_numbers = #tpu.dot_dimension_numbers<[1], [0], [0], [1], [0, 0, 1, 1], [], []>} : vector<16x16xf32>, vector<16x16xf32>, vector<16x16xf32> -> vector<16x16xf32>
    %c0_40 = arith.constant 0 : index
    %c1_41 = arith.constant 1 : index
    %c0_42 = arith.constant 0 : index
    %c0_43 = arith.constant 0 : index
    %32 = vector.load %arg5[%c0_40, %c1_41, %c0_42, %c0_43] : memref<1x3x1x16xf32, #tpu.memory_space<vmem>>, vector<1x1x1x16xf32>
    %33 = vector.shape_cast %32 : vector<1x1x1x16xf32> to vector<1x16xf32>
    %34 = vector.broadcast %33 : vector<1x16xf32> to vector<16x16xf32>
    %35 = arith.addf %31, %34 : vector<16x16xf32>
    %cst_44 = arith.constant 0.000000e+00 : f32
    %36 = vector.broadcast %cst_44 : f32 to vector<16x16xf32>
    %37 = arith.maximumf %35, %36 : vector<16x16xf32>
    %c0_45 = arith.constant 0 : index
    %c1_46 = arith.constant 1 : index
    %c0_47 = arith.constant 0 : index
    %c0_48 = arith.constant 0 : index
    %38 = vector.load %arg6[%c0_45, %c1_46, %c0_47, %c0_48] : memref<1x3x16x8xf32, #tpu.memory_space<vmem>>, vector<1x1x16x8xf32>
    %39 = vector.shape_cast %38 : vector<1x1x16x8xf32> to vector<16x8xf32>
    %cst_49 = arith.constant dense<0.000000e+00> : vector<16x8xf32>
    %40 = tpu.matmul %37, %39, %cst_49 {dimension_numbers = #tpu.dot_dimension_numbers<[1], [0], [0], [1], [0, 0, 1, 1], [], []>} : vector<16x16xf32>, vector<16x8xf32>, vector<16x8xf32> -> vector<16x8xf32>
    %cst_50 = arith.constant dense<0.000000e+00> : vector<16x8xf32>
    %41 = tpu.matmul %27, %40, %cst_50 {dimension_numbers = #tpu.dot_dimension_numbers<[1], [0], [0], [1], [0, 0, 1, 1], [], []>} : vector<16x16xf32>, vector<16x8xf32>, vector<16x8xf32> -> vector<16x8xf32>
    %c0_51 = arith.constant 0 : index
    %c1_52 = arith.constant 1 : index
    %c0_53 = arith.constant 0 : index
    %c0_54 = arith.constant 0 : index
    %42 = vector.load %arg7[%c0_51, %c1_52, %c0_53, %c0_54] : memref<1x3x1x8xf32, #tpu.memory_space<vmem>>, vector<1x1x1x8xf32>
    %43 = vector.shape_cast %42 : vector<1x1x1x8xf32> to vector<1x8xf32>
    %44 = vector.broadcast %43 : vector<1x8xf32> to vector<16x8xf32>
    %45 = arith.addf %41, %44 : vector<16x8xf32>
    %c0_55 = arith.constant 0 : index
    %c2 = arith.constant 2 : index
    %c0_56 = arith.constant 0 : index
    %c0_57 = arith.constant 0 : index
    %46 = vector.load %arg2[%c0_55, %c2, %c0_56, %c0_57] : memref<1x3x16x22xf32, #tpu.memory_space<vmem>>, vector<1x1x16x22xf32>
    %47 = vector.shape_cast %46 : vector<1x1x16x22xf32> to vector<16x22xf32>
    %c0_58 = arith.constant 0 : index
    %c2_59 = arith.constant 2 : index
    %c0_60 = arith.constant 0 : index
    %c0_61 = arith.constant 0 : index
    %48 = vector.load %arg3[%c0_58, %c2_59, %c0_60, %c0_61] : memref<1x3x16x16xf32, #tpu.memory_space<vmem>>, vector<1x1x16x16xf32>
    %49 = vector.shape_cast %48 : vector<1x1x16x16xf32> to vector<16x16xf32>
    %c0_62 = arith.constant 0 : index
    %c2_63 = arith.constant 2 : index
    %c0_64 = arith.constant 0 : index
    %c0_65 = arith.constant 0 : index
    %50 = vector.load %arg4[%c0_62, %c2_63, %c0_64, %c0_65] : memref<1x3x22x16xf32, #tpu.memory_space<vmem>>, vector<1x1x22x16xf32>
    %51 = vector.shape_cast %50 : vector<1x1x22x16xf32> to vector<22x16xf32>
    %cst_66 = arith.constant dense<0.000000e+00> : vector<16x16xf32>
    %52 = tpu.matmul %47, %51, %cst_66 {dimension_numbers = #tpu.dot_dimension_numbers<[1], [0], [0], [1], [0, 0, 1, 1], [], []>} : vector<16x22xf32>, vector<22x16xf32>, vector<16x16xf32> -> vector<16x16xf32>
    %cst_67 = arith.constant dense<0.000000e+00> : vector<16x16xf32>
    %53 = tpu.matmul %49, %52, %cst_67 {dimension_numbers = #tpu.dot_dimension_numbers<[1], [0], [0], [1], [0, 0, 1, 1], [], []>} : vector<16x16xf32>, vector<16x16xf32>, vector<16x16xf32> -> vector<16x16xf32>
    %c0_68 = arith.constant 0 : index
    %c2_69 = arith.constant 2 : index
    %c0_70 = arith.constant 0 : index
    %c0_71 = arith.constant 0 : index
    %54 = vector.load %arg5[%c0_68, %c2_69, %c0_70, %c0_71] : memref<1x3x1x16xf32, #tpu.memory_space<vmem>>, vector<1x1x1x16xf32>
    %55 = vector.shape_cast %54 : vector<1x1x1x16xf32> to vector<1x16xf32>
    %56 = vector.broadcast %55 : vector<1x16xf32> to vector<16x16xf32>
    %57 = arith.addf %53, %56 : vector<16x16xf32>
    %cst_72 = arith.constant 0.000000e+00 : f32
    %58 = vector.broadcast %cst_72 : f32 to vector<16x16xf32>
    %59 = arith.maximumf %57, %58 : vector<16x16xf32>
    %c0_73 = arith.constant 0 : index
    %c2_74 = arith.constant 2 : index
    %c0_75 = arith.constant 0 : index
    %c0_76 = arith.constant 0 : index
    %60 = vector.load %arg6[%c0_73, %c2_74, %c0_75, %c0_76] : memref<1x3x16x8xf32, #tpu.memory_space<vmem>>, vector<1x1x16x8xf32>
    %61 = vector.shape_cast %60 : vector<1x1x16x8xf32> to vector<16x8xf32>
    %cst_77 = arith.constant dense<0.000000e+00> : vector<16x8xf32>
    %62 = tpu.matmul %59, %61, %cst_77 {dimension_numbers = #tpu.dot_dimension_numbers<[1], [0], [0], [1], [0, 0, 1, 1], [], []>} : vector<16x16xf32>, vector<16x8xf32>, vector<16x8xf32> -> vector<16x8xf32>
    %cst_78 = arith.constant dense<0.000000e+00> : vector<16x8xf32>
    %63 = tpu.matmul %49, %62, %cst_78 {dimension_numbers = #tpu.dot_dimension_numbers<[1], [0], [0], [1], [0, 0, 1, 1], [], []>} : vector<16x16xf32>, vector<16x8xf32>, vector<16x8xf32> -> vector<16x8xf32>
    %c0_79 = arith.constant 0 : index
    %c2_80 = arith.constant 2 : index
    %c0_81 = arith.constant 0 : index
    %c0_82 = arith.constant 0 : index
    %64 = vector.load %arg7[%c0_79, %c2_80, %c0_81, %c0_82] : memref<1x3x1x8xf32, #tpu.memory_space<vmem>>, vector<1x1x1x8xf32>
    %65 = vector.shape_cast %64 : vector<1x1x1x8xf32> to vector<1x8xf32>
    %66 = vector.broadcast %65 : vector<1x8xf32> to vector<16x8xf32>
    %67 = arith.addf %63, %66 : vector<16x8xf32>
    %c0_83 = arith.constant 0 : index
    %c0_84 = arith.constant 0 : index
    %c0_85 = arith.constant 0 : index
    %68 = vector.load %arg8[%c0_83, %c0_84, %c0_85] : memref<1x8x8xf32, #tpu.memory_space<vmem>>, vector<1x8x8xf32>
    %69 = vector.shape_cast %68 : vector<1x8x8xf32> to vector<8x8xf32>
    %c0_86 = arith.constant 0 : index
    %c0_87 = arith.constant 0 : index
    %c0_88 = arith.constant 0 : index
    %70 = vector.load %arg9[%c0_86, %c0_87, %c0_88] : memref<1x1x8xf32, #tpu.memory_space<vmem>>, vector<1x1x8xf32>
    %71 = vector.shape_cast %70 : vector<1x1x8xf32> to vector<1x8xf32>
    %cst_89 = arith.constant 0.000000e+00 : f32
    %72 = vector.broadcast %cst_89 : f32 to vector<16x8xf32>
    %cst_90 = arith.constant dense<0.000000e+00> : vector<16x8xf32>
    %73 = tpu.matmul %72, %69, %cst_90 {dimension_numbers = #tpu.dot_dimension_numbers<[1], [0], [0], [1], [0, 0, 1, 1], [], []>} : vector<16x8xf32>, vector<8x8xf32>, vector<16x8xf32> -> vector<16x8xf32>
    %74 = arith.addf %23, %73 : vector<16x8xf32>
    %75 = vector.broadcast %71 : vector<1x8xf32> to vector<16x8xf32>
    %76 = arith.addf %74, %75 : vector<16x8xf32>
    %77 = math.tanh %76 : vector<16x8xf32>
    %cst_91 = arith.constant dense<0.000000e+00> : vector<16x8xf32>
    %78 = tpu.matmul %77, %69, %cst_91 {dimension_numbers = #tpu.dot_dimension_numbers<[1], [0], [0], [1], [0, 0, 1, 1], [], []>} : vector<16x8xf32>, vector<8x8xf32>, vector<16x8xf32> -> vector<16x8xf32>
    %79 = arith.addf %45, %78 : vector<16x8xf32>
    %80 = vector.broadcast %71 : vector<1x8xf32> to vector<16x8xf32>
    %81 = arith.addf %79, %80 : vector<16x8xf32>
    %82 = math.tanh %81 : vector<16x8xf32>
    %cst_92 = arith.constant dense<0.000000e+00> : vector<16x8xf32>
    %83 = tpu.matmul %82, %69, %cst_92 {dimension_numbers = #tpu.dot_dimension_numbers<[1], [0], [0], [1], [0, 0, 1, 1], [], []>} : vector<16x8xf32>, vector<8x8xf32>, vector<16x8xf32> -> vector<16x8xf32>
    %84 = arith.addf %67, %83 : vector<16x8xf32>
    %85 = vector.broadcast %71 : vector<1x8xf32> to vector<16x8xf32>
    %86 = arith.addf %84, %85 : vector<16x8xf32>
    %87 = math.tanh %86 : vector<16x8xf32>
    %88 = tpu.concatenate %77, %82, %87 in 0 : vector<16x8xf32>, vector<16x8xf32>, vector<16x8xf32> -> vector<48x8xf32>
    %89 = math.tanh %88 : vector<48x8xf32>
    %c0_93 = arith.constant 0 : index
    %c0_94 = arith.constant 0 : index
    %c0_95 = arith.constant 0 : index
    %90 = vector.load %arg10[%c0_93, %c0_94, %c0_95] : memref<1x8x1xf32, #tpu.memory_space<vmem>>, vector<1x8x1xf32>
    %91 = vector.shape_cast %90 : vector<1x8x1xf32> to vector<8x1xf32>
    %cst_96 = arith.constant dense<0.000000e+00> : vector<48x1xf32>
    %92 = tpu.matmul %89, %91, %cst_96 {dimension_numbers = #tpu.dot_dimension_numbers<[1], [0], [0], [1], [0, 0, 1, 1], [], []>} : vector<48x8xf32>, vector<8x1xf32>, vector<48x1xf32> -> vector<48x1xf32>
    %c0_97 = arith.constant 0 : index
    %c0_98 = arith.constant 0 : index
    %c0_99 = arith.constant 0 : index
    %93 = vector.load %arg11[%c0_97, %c0_98, %c0_99] : memref<1x1x1xf32, #tpu.memory_space<vmem>>, vector<1x1x1xf32>
    %94 = vector.shape_cast %93 : vector<1x1x1xf32> to vector<1x1xf32>
    %95 = vector.broadcast %94 : vector<1x1xf32> to vector<48x1xf32>
    %96 = arith.addf %92, %95 : vector<48x1xf32>
    %97 = tpu.iota {dimensions = array<i32: 0>} : vector<48x1xi32>
    %c16_i32 = arith.constant 16 : i32
    %98 = arith.muli %1, %c16_i32 : i32
    %99 = vector.broadcast %98 : i32 to vector<48x1xi32>
    %100 = arith.cmpi slt, %97, %99 : vector<48x1xi32>
    %cst_100 = arith.constant -1.000000e+30 : f32
    %101 = vector.broadcast %cst_100 : f32 to vector<48x1xf32>
    %102 = arith.select %100, %96, %101 : vector<48x1xi1>, vector<48x1xf32>
    %103 = vector.extract_strided_slice %102 {offsets = [0, 0], sizes = [16, 1], strides = [1, 1]} : vector<48x1xf32> to vector<16x1xf32>
    %104 = vector.extract_strided_slice %102 {offsets = [16, 0], sizes = [16, 1], strides = [1, 1]} : vector<48x1xf32> to vector<16x1xf32>
    %105 = vector.extract_strided_slice %102 {offsets = [32, 0], sizes = [16, 1], strides = [1, 1]} : vector<48x1xf32> to vector<16x1xf32>
    %106 = arith.maximumf %103, %104 : vector<16x1xf32>
    %107 = arith.maximumf %106, %105 : vector<16x1xf32>
    %108 = arith.subf %103, %107 : vector<16x1xf32>
    %109 = math.exp %108 : vector<16x1xf32>
    %110 = arith.subf %104, %107 : vector<16x1xf32>
    %111 = math.exp %110 : vector<16x1xf32>
    %112 = arith.subf %105, %107 : vector<16x1xf32>
    %113 = math.exp %112 : vector<16x1xf32>
    %114 = arith.addf %109, %111 : vector<16x1xf32>
    %115 = arith.addf %114, %113 : vector<16x1xf32>
    %cst_101 = arith.constant 1.000000e+00 : f32
    %116 = vector.broadcast %cst_101 : f32 to vector<16x1xf32>
    %117 = arith.divf %116, %115 : vector<16x1xf32>
    %118 = arith.mulf %109, %117 : vector<16x1xf32>
    %119 = vector.broadcast %118 : vector<16x1xf32> to vector<16x8xf32>
    %120 = arith.mulf %119, %77 : vector<16x8xf32>
    %121 = arith.mulf %111, %117 : vector<16x1xf32>
    %122 = vector.broadcast %121 : vector<16x1xf32> to vector<16x8xf32>
    %123 = arith.mulf %122, %82 : vector<16x8xf32>
    %124 = arith.addf %120, %123 : vector<16x8xf32>
    %125 = arith.mulf %113, %117 : vector<16x1xf32>
    %126 = vector.broadcast %125 : vector<16x1xf32> to vector<16x8xf32>
    %127 = arith.mulf %126, %87 : vector<16x8xf32>
    %128 = arith.addf %124, %127 : vector<16x8xf32>
    %c0_102 = arith.constant 0 : index
    %c0_103 = arith.constant 0 : index
    %c0_104 = arith.constant 0 : index
    %129 = vector.load %arg12[%c0_102, %c0_103, %c0_104] : memref<1x16x8xf32, #tpu.memory_space<vmem>>, vector<1x16x8xf32>
    %130 = vector.shape_cast %129 : vector<1x16x8xf32> to vector<16x8xf32>
    %131 = vector.shape_cast %128 : vector<16x8xf32> to vector<1x16x8xf32>
    tpu.vector_store %arg12[%c0_102, %c0_103, %c0_104], %131 {strides = array<i32>} : memref<1x16x8xf32, #tpu.memory_space<vmem>>, vector<1x16x8xf32>,
    return
  }
  func.func @transform_0(%arg0: i32, %arg1: memref<3xi32, #tpu.memory_space<smem>>) -> (i32, i32, i32, i32) {
    %c0_i32 = arith.constant 0 : i32
    %c0_i32_0 = arith.constant 0 : i32
    %c0_i32_1 = arith.constant 0 : i32
    %c0_i32_2 = arith.constant 0 : i32
    return %arg0, %c0_i32, %c0_i32_0, %c0_i32_1 : i32, i32, i32, i32
  }
  func.func @transform_1(%arg0: i32, %arg1: memref<3xi32, #tpu.memory_space<smem>>) -> (i32, i32, i32, i32) {
    %c0_i32 = arith.constant 0 : i32
    %c0_i32_0 = arith.constant 0 : i32
    %c0_i32_1 = arith.constant 0 : i32
    %c0_i32_2 = arith.constant 0 : i32
    return %arg0, %c0_i32, %c0_i32_0, %c0_i32_1 : i32, i32, i32, i32
  }
  func.func @transform_2(%arg0: i32, %arg1: memref<3xi32, #tpu.memory_space<smem>>) -> (i32, i32, i32, i32) {
    %c0_i32 = arith.constant 0 : i32
    %c0_i32_0 = arith.constant 0 : i32
    %c0_i32_1 = arith.constant 0 : i32
    %c0_i32_2 = arith.constant 0 : i32
    return %arg0, %c0_i32, %c0_i32_0, %c0_i32_1 : i32, i32, i32, i32
  }
  func.func @transform_3(%arg0: i32, %arg1: memref<3xi32, #tpu.memory_space<smem>>) -> (i32, i32, i32, i32) {
    %c0_i32 = arith.constant 0 : i32
    %c0_i32_0 = arith.constant 0 : i32
    %c0_i32_1 = arith.constant 0 : i32
    %c0_i32_2 = arith.constant 0 : i32
    return %arg0, %c0_i32, %c0_i32_0, %c0_i32_1 : i32, i32, i32, i32
  }
  func.func @transform_4(%arg0: i32, %arg1: memref<3xi32, #tpu.memory_space<smem>>) -> (i32, i32, i32, i32) {
    %c0_i32 = arith.constant 0 : i32
    %c0_i32_0 = arith.constant 0 : i32
    %c0_i32_1 = arith.constant 0 : i32
    %c0_i32_2 = arith.constant 0 : i32
    return %arg0, %c0_i32, %c0_i32_0, %c0_i32_1 : i32, i32, i32, i32
  }
  func.func @transform_5(%arg0: i32, %arg1: memref<3xi32, #tpu.memory_space<smem>>) -> (i32, i32, i32, i32) {
    %c0_i32 = arith.constant 0 : i32
    %c0_i32_0 = arith.constant 0 : i32
    %c0_i32_1 = arith.constant 0 : i32
    %c0_i32_2 = arith.constant 0 : i32
    return %arg0, %c0_i32, %c0_i32_0, %c0_i32_1 : i32, i32, i32, i32
  }
  func.func @transform_6(%arg0: i32, %arg1: memref<3xi32, #tpu.memory_space<smem>>) -> (i32, i32, i32) {
    %c0_i32 = arith.constant 0 : i32
    %c0_i32_0 = arith.constant 0 : i32
    %c0_i32_1 = arith.constant 0 : i32
    return %arg0, %c0_i32, %c0_i32_0 : i32, i32, i32
  }
  func.func @transform_7(%arg0: i32, %arg1: memref<3xi32, #tpu.memory_space<smem>>) -> (i32, i32, i32) {
    %c0_i32 = arith.constant 0 : i32
    %c0_i32_0 = arith.constant 0 : i32
    %c0_i32_1 = arith.constant 0 : i32
    return %arg0, %c0_i32, %c0_i32_0 : i32, i32, i32
  }
  func.func @transform_8(%arg0: i32, %arg1: memref<3xi32, #tpu.memory_space<smem>>) -> (i32, i32, i32) {
    %c0_i32 = arith.constant 0 : i32
    %c0_i32_0 = arith.constant 0 : i32
    %c0_i32_1 = arith.constant 0 : i32
    return %arg0, %c0_i32, %c0_i32_0 : i32, i32, i32
  }
  func.func @transform_9(%arg0: i32, %arg1: memref<3xi32, #tpu.memory_space<smem>>) -> (i32, i32, i32) {
    %c0_i32 = arith.constant 0 : i32
    %c0_i32_0 = arith.constant 0 : i32
    %c0_i32_1 = arith.constant 0 : i32
    return %arg0, %c0_i32, %c0_i32_0 : i32, i32, i32
  }
  func.func @transform_10(%arg0: i32, %arg1: memref<3xi32, #tpu.memory_space<smem>>) -> (i32, i32, i32) {
    %c0_i32 = arith.constant 0 : i32
    %c0_i32_0 = arith.constant 0 : i32
    %c0_i32_1 = arith.constant 0 : i32
    return %arg0, %c0_i32, %c0_i32_0 : i32, i32, i32
  }
}

module attributes {stable_mosaic.version = 11 : i64} {
  func.func @_attn_pool_kernel(%arg0: memref<3x16x8xf32, #tpu.memory_space<vmem>>, %arg1: memref<8x1xf32, #tpu.memory_space<vmem>>, %arg2: memref<1x1xf32, #tpu.memory_space<vmem>>, %arg3: memref<16x8xf32, #tpu.memory_space<vmem>>) attributes {dimension_semantics = [], scalar_prefetch = 0 : i64, scratch_operands = 0 : i64, tpu.core_type = #tpu.core_type<tc>} {
    %c0 = arith.constant 0 : index
    %c0_0 = arith.constant 0 : index
    %c0_1 = arith.constant 0 : index
    %0 = vector.load %arg0[%c0, %c0_0, %c0_1] : memref<3x16x8xf32, #tpu.memory_space<vmem>>, vector<1x16x8xf32>
    %1 = vector.shape_cast %0 : vector<1x16x8xf32> to vector<16x8xf32>
    %c1 = arith.constant 1 : index
    %c0_2 = arith.constant 0 : index
    %c0_3 = arith.constant 0 : index
    %2 = vector.load %arg0[%c1, %c0_2, %c0_3] : memref<3x16x8xf32, #tpu.memory_space<vmem>>, vector<1x16x8xf32>
    %3 = vector.shape_cast %2 : vector<1x16x8xf32> to vector<16x8xf32>
    %c2 = arith.constant 2 : index
    %c0_4 = arith.constant 0 : index
    %c0_5 = arith.constant 0 : index
    %4 = vector.load %arg0[%c2, %c0_4, %c0_5] : memref<3x16x8xf32, #tpu.memory_space<vmem>>, vector<1x16x8xf32>
    %5 = vector.shape_cast %4 : vector<1x16x8xf32> to vector<16x8xf32>
    %6 = tpu.concatenate %1, %3, %5 in 0 : vector<16x8xf32>, vector<16x8xf32>, vector<16x8xf32> -> vector<48x8xf32>
    %7 = math.tanh %6 : vector<48x8xf32>
    %c0_6 = arith.constant 0 : index
    %c0_7 = arith.constant 0 : index
    %8 = vector.load %arg1[%c0_6, %c0_7] : memref<8x1xf32, #tpu.memory_space<vmem>>, vector<8x1xf32>
    %cst = arith.constant dense<0.000000e+00> : vector<48x1xf32>
    %9 = tpu.matmul %7, %8, %cst {dimension_numbers = #tpu.dot_dimension_numbers<[1], [0], [0], [1], [0, 0, 1, 1], [], []>} : vector<48x8xf32>, vector<8x1xf32>, vector<48x1xf32> -> vector<48x1xf32>
    %c0_8 = arith.constant 0 : index
    %c0_9 = arith.constant 0 : index
    %10 = vector.load %arg2[%c0_8, %c0_9] : memref<1x1xf32, #tpu.memory_space<vmem>>, vector<1x1xf32>
    %11 = vector.broadcast %10 : vector<1x1xf32> to vector<48x1xf32>
    %12 = arith.addf %9, %11 : vector<48x1xf32>
    %13 = vector.extract_strided_slice %12 {offsets = [0, 0], sizes = [16, 1], strides = [1, 1]} : vector<48x1xf32> to vector<16x1xf32>
    %14 = vector.extract_strided_slice %12 {offsets = [16, 0], sizes = [16, 1], strides = [1, 1]} : vector<48x1xf32> to vector<16x1xf32>
    %15 = vector.extract_strided_slice %12 {offsets = [32, 0], sizes = [16, 1], strides = [1, 1]} : vector<48x1xf32> to vector<16x1xf32>
    %16 = arith.maximumf %13, %14 : vector<16x1xf32>
    %17 = arith.maximumf %16, %15 : vector<16x1xf32>
    %18 = arith.subf %13, %17 : vector<16x1xf32>
    %19 = math.exp %18 : vector<16x1xf32>
    %20 = arith.subf %14, %17 : vector<16x1xf32>
    %21 = math.exp %20 : vector<16x1xf32>
    %22 = arith.subf %15, %17 : vector<16x1xf32>
    %23 = math.exp %22 : vector<16x1xf32>
    %24 = arith.addf %19, %21 : vector<16x1xf32>
    %25 = arith.addf %24, %23 : vector<16x1xf32>
    %cst_10 = arith.constant 1.000000e+00 : f32
    %26 = vector.broadcast %cst_10 : f32 to vector<16x1xf32>
    %27 = arith.divf %26, %25 : vector<16x1xf32>
    %28 = arith.mulf %19, %27 : vector<16x1xf32>
    %29 = vector.broadcast %28 : vector<16x1xf32> to vector<16x8xf32>
    %30 = arith.mulf %29, %1 : vector<16x8xf32>
    %31 = arith.mulf %21, %27 : vector<16x1xf32>
    %32 = vector.broadcast %31 : vector<16x1xf32> to vector<16x8xf32>
    %33 = arith.mulf %32, %3 : vector<16x8xf32>
    %34 = arith.addf %30, %33 : vector<16x8xf32>
    %35 = arith.mulf %23, %27 : vector<16x1xf32>
    %36 = vector.broadcast %35 : vector<16x1xf32> to vector<16x8xf32>
    %37 = arith.mulf %36, %5 : vector<16x8xf32>
    %38 = arith.addf %34, %37 : vector<16x8xf32>
    %c0_11 = arith.constant 0 : index
    %c0_12 = arith.constant 0 : index
    %39 = vector.load %arg3[%c0_11, %c0_12] : memref<16x8xf32, #tpu.memory_space<vmem>>, vector<16x8xf32>
    tpu.vector_store %arg3[%c0_11, %c0_12], %38 {strides = array<i32>} : memref<16x8xf32, #tpu.memory_space<vmem>>, vector<16x8xf32>,
    return
  }
}

</mosaic_0001>

<llo_original>
// kernel: pyramid_forward.3
$region0: #{pyramid_forward.3}
  #allocation0 [shape = 'u32[]', space=smem, size = 0x4, offset = 0x4, fixed_abs, tag = 'smem constant byte address 0x4 - core index']
  #allocation1 [shape = 'u32[72,128]{1,0:T(1,128)}', space=vmem, size = 0x9000, scoped, tag = 'internal scratch']
  #allocation2 [shape = 'f32[1,1]{1,0:T(1,128)S(1)}', space=vmem, size = 0x200, scoped, tag = 'scoped memory for pyramid_forward.3']
  %s0 = inlined_call_operand.vmem [shape: f32[3,16,8], index: 0, kind: input, shape index: {}]
  %s1 = inlined_call_operand.vmem [shape: f32[8,1], index: 1, kind: input, shape index: {}]
  %s2 = inlined_call_operand.<no memory space> [shape: f32[1,1], index: 2, kind: input, shape index: {}]
  %s3 = inlined_call_operand.vmem [shape: f32[16,8], index: 3, kind: output, shape index: {}]
  %s4 = sld [smem:[#allocation0]]
  $region22: #{pyramid_forward.3} parent=0
    _
  %s6 = ssub.s32 1, %s4
  %s7 = scalar_select 0, %s6, %s4
  %v8 = vstv %s2
  %9 = vst [vmem:[#allocation2] sm:$0x1] %v8
  // Predicated region
  $region2: #{pyramid_forward.3} parent=0 // pred_check
    _
  $region3: #{pyramid_forward.3} parent=0 // pred_check_branch
    %11 = sbr.rel (0) target = $region5
  $region4: #{pyramid_forward.3} parent=0 // pred_region
    _
  $region5: #{pyramid_forward.3} parent=0 // pred_fallthru
    _
  // Predicated region
  $region6: #{pyramid_forward.3} parent=0 // pred_check
    _
  $region7: #{pyramid_forward.3} parent=0 // pred_check_branch
    %13 = sbr.rel (0) target = $region9
  $region8: #{pyramid_forward.3} parent=0 // pred_region
    _
  $region9: #{pyramid_forward.3} parent=0 // pred_fallthru
    _
  // Predicated region
  $region10: #{pyramid_forward.3} parent=0 // pred_check
    _
  $region11: #{pyramid_forward.3} parent=0 // pred_check_branch
    %15 = sbr.rel (0) target = $region13
  $region12: #{pyramid_forward.3} parent=0 // pred_region
    _
  $region13: #{pyramid_forward.3} parent=0 // pred_fallthru
    _
  %v16 = vld [vmem:[%s0] sm:$0xff]
  %v17 = vld [vmem:[%s0 + $0x8] sm:$0xff]
  %s18 = scalar_lea.vmem %s0, 16
  %v19 = vld [vmem:[%s18] sm:$0xff]
  %v20 = vld [vmem:[%s18 + $0x8] sm:$0xff]
  %s21 = scalar_lea.vmem %s0, 32
  %v22 = vld [vmem:[%s21] sm:$0xff]
  %v23 = vld [vmem:[%s21 + $0x8] sm:$0xff]
  %v24 = vtanh.pop %v16
  %v25 = vtanh.pop %v17
  %v26 = vtanh.pop %v19
  %v27 = vtanh.pop %v20
  %v28 = vtanh.pop %v22
  %v29 = vtanh.pop %v23
  %v30 = vld [vmem:[%s1] sm:$0xff]
  %v31 = vld [vmem:[#allocation2] sm:$0x1]
  %v33 = vperm.slane %v31, 0
  %vm35 = vcmask 64512
  %v37 = vsel %vm35, %v24, 0
  %v40 = vsel %vm35, %v25, 0
  %v43 = vsel %vm35, %v26, 0
  %v46 = vsel %vm35, %v27, 0
  %v49 = vsel %vm35, %v28, 0
  %v52 = vsel %vm35, %v29, 0
  %54 = vmatpush.msra.mxu0 0.0
  %55 = vmatpush.msra.mxu0 0.0
  %56 = vmatpush.msra.mxu0 0.0
  %57 = vmatpush.msra.mxu0 0.0
  %58 = vmatpush.msra.mxu0 0.0
  %59 = vmatpush.msra.mxu0 0.0
  %60 = vmatpush.msra.mxu0 0.0
  %61 = vmatpush.msra.mxu0 0.0
  %62 = vmatpush.msra.mxu0 0.0
  %63 = vmatpush.msra.mxu0 0.0
  %64 = vmatpush.msra.mxu0 0.0
  %65 = vmatpush.msra.mxu0 0.0
  %66 = vmatpush.msra.mxu0 0.0
  %67 = vmatpush.msra.mxu0 0.0
  %68 = vmatpush.msra.mxu0 0.0
  %69 = vmatpush.msra.mxu0 %v30
  %70 = vmatmul.f32.gmra.mxu0 %v37
  %v71 = vpop.f32.mrf.mxu0
  %v72 = vadd.f32 %v33, %v71
  %73 = vmatmul.f32.gmra.mxu0 %v40
  %v74 = vpop.f32.mrf.mxu0
  %v75 = vadd.f32 %v33, %v74
  %76 = vmatmul.f32.gmra.mxu0 %v43
  %v77 = vpop.f32.mrf.mxu0
  %v78 = vadd.f32 %v33, %v77
  %79 = vmatmul.f32.gmra.mxu0 %v46
  %v80 = vpop.f32.mrf.mxu0
  %v81 = vadd.f32 %v33, %v80
  %82 = vmatmul.f32.gmra.mxu0 %v49
  %v83 = vpop.f32.mrf.mxu0
  %v84 = vadd.f32 %v33, %v83
  %85 = vmatmul.f32.gmra.mxu0 %v52
  %v86 = vpop.f32.mrf.mxu0
  %v87 = vadd.f32 %v33, %v86
  %88 = vdwg.mxu0
  %v89 = vmax.f32 %v72, %v78
  %v90 = vmax.f32 %v75, %v81
  %v91 = vmax.f32 %v89, %v84
  %v92 = vmax.f32 %v90, %v87
  %v93 = vsub.f32 %v72, %v91
  %v94 = vsub.f32 %v75, %v92
  %v95 = vmul.f32 %v93, 1.442695
  %v96 = vpow.pop %v95
  %v97 = vmul.f32 %v94, 1.442695
  %v98 = vpow.pop %v97
  %v99 = vsub.f32 %v78, %v91
  %v100 = vsub.f32 %v81, %v92
  %v101 = vmul.f32 %v99, 1.442695
  %v102 = vpow.pop %v101
  %v103 = vmul.f32 %v100, 1.442695
  %v104 = vpow.pop %v103
  %v105 = vsub.f32 %v84, %v91
  %v106 = vsub.f32 %v87, %v92
  %v107 = vmul.f32 %v105, 1.442695
  %v108 = vpow.pop %v107
  %v109 = vmul.f32 %v106, 1.442695
  %v110 = vpow.pop %v109
  %v111 = vadd.f32 %v96, %v102
  %v112 = vadd.f32 %v98, %v104
  %v113 = vadd.f32 %v111, %v108
  %v114 = vadd.f32 %v112, %v110
  %v115 = vrcp.pop %v113
  %v116 = vmul.f32 %v113, %v115
  %v117 = vsub.f32 1.0, %v116
  %v118 = vmul.f32 %v115, %v117
  %v119 = vadd.f32 %v115, %v118
  %vm120 = vweird.f32 %v113
  %vm121 = vweird.f32 %v115
  %vm122 = vmor %vm120, %vm121
  %v123 = vsel %vm122, %v115, %v119
  %v124 = vand.u32 2147483647, %v113
  %vm125 = vcmp.eq.f32.partialorder %v124, 8.507059e+37
  %v126 = vand.u32 %v113, 2147483648
  %v127 = vor.u32 1.1754944e-38, %v126
  %v128 = vsel %vm125, %v127, %v123
  %v129 = vmul.f32 1.0, %v128
  %v130 = vrcp.pop %v114
  %v131 = vmul.f32 %v114, %v130
  %v132 = vsub.f32 1.0, %v131
  %v133 = vmul.f32 %v130, %v132
  %v134 = vadd.f32 %v130, %v133
  %vm135 = vweird.f32 %v114
  %vm136 = vweird.f32 %v130
  %vm137 = vmor %vm135, %vm136
  %v138 = vsel %vm137, %v130, %v134
  %v139 = vand.u32 2147483647, %v114
  %vm140 = vcmp.eq.f32.partialorder %v139, 8.507059e+37
  %v141 = vand.u32 %v114, 2147483648
  %v142 = vor.u32 1.1754944e-38, %v141
  %v143 = vsel %vm140, %v142, %v138
  %v144 = vmul.f32 1.0, %v143
  %v145 = vmul.f32 %v96, %v129
  %v146 = vmul.f32 %v98, %v144
  %148 = vset.pattern.permute.xlu0 0
  %149 = vperm.xlu0 %148, %v145
  %v150 = vpop.permute.xlu0 %149
  %153 = vset.pattern.permute.xlu0 0
  %154 = vperm.xlu0 %153, %v146
  %v155 = vpop.permute.xlu0 %154
  %v157 = vmul.f32 %v150, %v16
  %v158 = vmul.f32 %v155, %v17
  %v159 = vmul.f32 %v102, %v129
  %v160 = vmul.f32 %v104, %v144
  %162 = vset.pattern.permute.xlu0 0
  %163 = vperm.xlu0 %162, %v159
  %v164 = vpop.permute.xlu0 %163
  %167 = vset.pattern.permute.xlu0 0
  %168 = vperm.xlu0 %167, %v160
  %v169 = vpop.permute.xlu0 %168
  %v171 = vmul.f32 %v164, %v19
  %v172 = vmul.f32 %v169, %v20
  %v173 = vadd.f32 %v157, %v171
  %v174 = vadd.f32 %v158, %v172
  %v175 = vmul.f32 %v108, %v129
  %v176 = vmul.f32 %v110, %v144
  %178 = vset.pattern.permute.xlu0 0
  %179 = vperm.xlu0 %178, %v175
  %v180 = vpop.permute.xlu0 %179
  %183 = vset.pattern.permute.xlu0 0
  %184 = vperm.xlu0 %183, %v176
  %v185 = vpop.permute.xlu0 %184
  %v187 = vmul.f32 %v180, %v22
  %v188 = vmul.f32 %v185, %v23
  %v189 = vadd.f32 %v173, %v187
  %v190 = vadd.f32 %v174, %v188
  %191 = vst.msk [vmem:[%s3] sm:$0xff] %vm35, %v189
  %192 = vst.msk [vmem:[%s3 + $0x8] sm:$0xff] %vm35, %v190
  // Predicated region
  $region14: #{pyramid_forward.3} parent=0 // pred_check
    _
  $region15: #{pyramid_forward.3} parent=0 // pred_check_branch
    %194 = sbr.rel (0) target = $region17
  $region16: #{pyramid_forward.3} parent=0 // pred_region
    _
  $region17: #{pyramid_forward.3} parent=0 // pred_fallthru
    _
  // Predicated region
  $region18: #{pyramid_forward.3} parent=0 // pred_check
    _
  $region19: #{pyramid_forward.3} parent=0 // pred_check_branch
    %196 = sbr.rel (0) target = $region21
  $region20: #{pyramid_forward.3} parent=0 // pred_region
    _
  $region21: #{pyramid_forward.3} parent=0 // pred_fallthru
    _

// kernel: pyramid_forward.2
$region0: #{pyramid_forward.2}
  #allocation0 [shape = 'u32[]', space=smem, size = 0x4, offset = 0x4, fixed_abs, tag = 'smem constant byte address 0x4 - core index']
  #allocation1 [shape = 'u32[72,128]{1,0:T(1,128)}', space=vmem, size = 0x9000, scoped, tag = 'internal scratch']
  #allocation2 [shape = 's32[1]{0}', space=sflag, size = 0x4, scoped, tag = 'scoped memory for pyramid_forward.2']
  #allocation3 [shape = 'u8[512]{0}', space=smem, size = 0x200, scoped, tag = 'prefetched SMEM operand 0']
  %s0 = inlined_call_operand.vmem [shape: s32[3], index: 0, kind: input, shape index: {}]
  %s1 = inlined_call_operand.vmem [shape: f32[3,3,16,22], index: 1, kind: input, shape index: {}]
  %s2 = inlined_call_operand.vmem [shape: f32[3,3,16,16], index: 2, kind: input, shape index: {}]
  %s3 = inlined_call_operand.vmem [shape: f32[3,3,22,16], index: 3, kind: input, shape index: {}]
  %s4 = inlined_call_operand.vmem [shape: f32[3,3,1,16], index: 4, kind: input, shape index: {}]
  %s5 = inlined_call_operand.vmem [shape: f32[3,3,16,8], index: 5, kind: input, shape index: {}]
  %s6 = inlined_call_operand.vmem [shape: f32[3,3,1,8], index: 6, kind: input, shape index: {}]
  %s7 = inlined_call_operand.vmem [shape: f32[3,8,8], index: 7, kind: input, shape index: {}]
  %s8 = inlined_call_operand.vmem [shape: f32[3,1,8], index: 8, kind: input, shape index: {}]
  %s9 = inlined_call_operand.vmem [shape: f32[3,8,1], index: 9, kind: input, shape index: {}]
  %s10 = inlined_call_operand.vmem [shape: f32[3,1,1], index: 10, kind: input, shape index: {}]
  %s11 = inlined_call_operand.vmem [shape: f32[3,16,8], index: 11, kind: output, shape index: {}]
  %s12 = sld [smem:[#allocation0]]
  $region73: #{pyramid_forward.2} parent=0
    _
  %s14 = ssub.s32 1, %s12
  %s15 = scalar_select 0, %s14, %s12
  %s17 = sshll.u32 %s0, 4
  %s18 = int_to_ptr.vmem [resolvable:$true] %s17
  %20 = dma.vmem_to_smem %s18, 16, [#allocation3], [#allocation2]
  %22 = dma.done [#allocation2], 16
  %23 = sfence
  loop: start=0, step=1, limit=5
  $region2: #{pyramid_forward.2} parent=0 // loop_pre_header
    _
  $region3: #{pyramid_forward.2} parent=0 // loop_header
    %s25 = sphi 0, %s29
    %p26 = scmp.ge.s32.totalorder %s25, 5
    %s35 = sphi 0, %s37
    %s38 = sphi 0, %s35
    %s39 = sphi 0, %s38
    %s55 = sphi 0, %s39
    %s61 = sphi 0, %s63
    %s64 = sphi 0, %s61
    %s65 = sphi 0, %s64
    %s81 = sphi 0, %s65
    %s87 = sphi 0, %s89
    %s90 = sphi 0, %s87
    %s91 = sphi 0, %s90
    %s107 = sphi 0, %s91
    %s113 = sphi 0, %s115
    %s116 = sphi 0, %s113
    %s117 = sphi 0, %s116
    %s133 = sphi 0, %s117
    %s139 = sphi 0, %s141
    %s142 = sphi 0, %s139
    %s143 = sphi 0, %s142
    %s159 = sphi 0, %s143
    %s165 = sphi 0, %s167
    %s168 = sphi 0, %s165
    %s169 = sphi 0, %s168
    %s185 = sphi 0, %s169
    %s191 = sphi 0, %s193
    %s194 = sphi 0, %s191
    %s195 = sphi 0, %s194
    %s211 = sphi 0, %s195
    %s217 = sphi 0, %s219
    %s220 = sphi 0, %s217
    %s221 = sphi 0, %s220
    %s237 = sphi 0, %s221
    %s243 = sphi 0, %s245
    %s246 = sphi 0, %s243
    %s247 = sphi 0, %s246
    %s263 = sphi 0, %s247
    %s269 = sphi 0, %s271
    %s272 = sphi 0, %s269
    %s273 = sphi 0, %s272
    %s289 = sphi 0, %s273
    %s295 = sphi 0, %s297
    %s298 = sphi 0, %s295
    %s299 = sphi 0, %s298
    %s315 = sphi 0, %s299
  $region4: #{pyramid_forward.2} parent=0 // loop_header_branch
    %28 = sbr.rel (%p26) target = $region8
  $region5: #{pyramid_forward.2} parent=0 // loop_body
    %s30 = ssub.s32 %s25, 1
    %s31 = ssub.s32 %s25, 2
    %s32 = sadd.s32 %s25, 1
    %s33 = ssub.s32 %s25, %s32
    %p34 = scmp.eq.s32.totalorder %s33, 0
    %s36 = sadd.s32 %s35, 1
    %s37 = scalar_select %p34, %s35, %s36
    %p40 = pneg %p34
    %p41 = scmp.eq.s32.totalorder %s25, 2
    %p42 = por %p40, %p41
    %p43 = scmp.ne.s32.totalorder %s35, %s38
    %p44 = scmp.eq.s32.totalorder %s25, 0
    %p45 = por %p43, %p44
    %p46 = scmp.ne.s32.totalorder %s35, %s38
    %p47 = scmp.eq.s32.totalorder %s30, 2
    %p48 = por %p46, %p47
    %p49 = scmp.ne.s32.totalorder %s38, %s39
    %p50 = scmp.eq.s32.totalorder %s30, 0
    %p51 = por %p49, %p50
    %p52 = scmp.ne.s32.totalorder %s38, %s39
    %p53 = scmp.eq.s32.totalorder %s31, 2
    %p54 = por %p52, %p53
    %p56 = scmp.ne.s32.totalorder %s39, %s55
    %p57 = scmp.eq.s32.totalorder %s31, 0
    %p58 = por %p56, %p57
    %s59 = ssub.s32 %s25, %s32
    %p60 = scmp.eq.s32.totalorder %s59, 0
    %s62 = sadd.s32 %s61, 1
    %s63 = scalar_select %p60, %s61, %s62
    %p66 = pneg %p60
    %p67 = scmp.eq.s32.totalorder %s25, 2
    %p68 = por %p66, %p67
    %p69 = scmp.ne.s32.totalorder %s61, %s64
    %p70 = scmp.eq.s32.totalorder %s25, 0
    %p71 = por %p69, %p70
    %p72 = scmp.ne.s32.totalorder %s61, %s64
    %p73 = scmp.eq.s32.totalorder %s30, 2
    %p74 = por %p72, %p73
    %p75 = scmp.ne.s32.totalorder %s64, %s65
    %p76 = scmp.eq.s32.totalorder %s30, 0
    %p77 = por %p75, %p76
    %p78 = scmp.ne.s32.totalorder %s64, %s65
    %p79 = scmp.eq.s32.totalorder %s31, 2
    %p80 = por %p78, %p79
    %p82 = scmp.ne.s32.totalorder %s65, %s81
    %p83 = scmp.eq.s32.totalorder %s31, 0
    %p84 = por %p82, %p83
    %s85 = ssub.s32 %s25, %s32
    %p86 = scmp.eq.s32.totalorder %s85, 0
    %s88 = sadd.s32 %s87, 1
    %s89 = scalar_select %p86, %s87, %s88
    %p92 = pneg %p86
    %p93 = scmp.eq.s32.totalorder %s25, 2
    %p94 = por %p92, %p93
    %p95 = scmp.ne.s32.totalorder %s87, %s90
    %p96 = scmp.eq.s32.totalorder %s25, 0
    %p97 = por %p95, %p96
    %p98 = scmp.ne.s32.totalorder %s87, %s90
    %p99 = scmp.eq.s32.totalorder %s30, 2
    %p100 = por %p98, %p99
    %p101 = scmp.ne.s32.totalorder %s90, %s91
    %p102 = scmp.eq.s32.totalorder %s30, 0
    %p103 = por %p101, %p102
    %p104 = scmp.ne.s32.totalorder %s90, %s91
    %p105 = scmp.eq.s32.totalorder %s31, 2
    %p106 = por %p104, %p105
    %p108 = scmp.ne.s32.totalorder %s91, %s107
    %p109 = scmp.eq.s32.totalorder %s31, 0
    %p110 = por %p108, %p109
    %s111 = ssub.s32 %s25, %s32
    %p112 = scmp.eq.s32.totalorder %s111, 0
    %s114 = sadd.s32 %s113, 1
    %s115 = scalar_select %p112, %s113, %s114
    %p118 = pneg %p112
    %p119 = scmp.eq.s32.totalorder %s25, 2
    %p120 = por %p118, %p119
    %p121 = scmp.ne.s32.totalorder %s113, %s116
    %p122 = scmp.eq.s32.totalorder %s25, 0
    %p123 = por %p121, %p122
    %p124 = scmp.ne.s32.totalorder %s113, %s116
    %p125 = scmp.eq.s32.totalorder %s30, 2
    %p126 = por %p124, %p125
    %p127 = scmp.ne.s32.totalorder %s116, %s117
    %p128 = scmp.eq.s32.totalorder %s30, 0
    %p129 = por %p127, %p128
    %p130 = scmp.ne.s32.totalorder %s116, %s117
    %p131 = scmp.eq.s32.totalorder %s31, 2
    %p132 = por %p130, %p131
    %p134 = scmp.ne.s32.totalorder %s117, %s133
    %p135 = scmp.eq.s32.totalorder %s31, 0
    %p136 = por %p134, %p135
    %s137 = ssub.s32 %s25, %s32
    %p138 = scmp.eq.s32.totalorder %s137, 0
    %s140 = sadd.s32 %s139, 1
    %s141 = scalar_select %p138, %s139, %s140
    %p144 = pneg %p138
    %p145 = scmp.eq.s32.totalorder %s25, 2
    %p146 = por %p144, %p145
    %p147 = scmp.ne.s32.totalorder %s139, %s142
    %p148 = scmp.eq.s32.totalorder %s25, 0
    %p149 = por %p147, %p148
    %p150 = scmp.ne.s32.totalorder %s139, %s142
    %p151 = scmp.eq.s32.totalorder %s30, 2
    %p152 = por %p150, %p151
    %p153 = scmp.ne.s32.totalorder %s142, %s143
    %p154 = scmp.eq.s32.totalorder %s30, 0
    %p155 = por %p153, %p154
    %p156 = scmp.ne.s32.totalorder %s142, %s143
    %p157 = scmp.eq.s32.totalorder %s31, 2
    %p158 = por %p156, %p157
    %p160 = scmp.ne.s32.totalorder %s143, %s159
    %p161 = scmp.eq.s32.totalorder %s31, 0
    %p162 = por %p160, %p161
    %s163 = ssub.s32 %s25, %s32
    %p164 = scmp.eq.s32.totalorder %s163, 0
    %s166 = sadd.s32 %s165, 1
    %s167 = scalar_select %p164, %s165, %s166
    %p170 = pneg %p164
    %p171 = scmp.eq.s32.totalorder %s25, 2
    %p172 = por %p170, %p171
    %p173 = scmp.ne.s32.totalorder %s165, %s168
    %p174 = scmp.eq.s32.totalorder %s25, 0
    %p175 = por %p173, %p174
    %p176 = scmp.ne.s32.totalorder %s165, %s168
    %p177 = scmp.eq.s32.totalorder %s30, 2
    %p178 = por %p176, %p177
    %p179 = scmp.ne.s32.totalorder %s168, %s169
    %p180 = scmp.eq.s32.totalorder %s30, 0
    %p181 = por %p179, %p180
    %p182 = scmp.ne.s32.totalorder %s168, %s169
    %p183 = scmp.eq.s32.totalorder %s31, 2
    %p184 = por %p182, %p183
    %p186 = scmp.ne.s32.totalorder %s169, %s185
    %p187 = scmp.eq.s32.totalorder %s31, 0
    %p188 = por %p186, %p187
    %s189 = ssub.s32 %s25, %s32
    %p190 = scmp.eq.s32.totalorder %s189, 0
    %s192 = sadd.s32 %s191, 1
    %s193 = scalar_select %p190, %s191, %s192
    %p196 = pneg %p190
    %p197 = scmp.eq.s32.totalorder %s25, 2
    %p198 = por %p196, %p197
    %p199 = scmp.ne.s32.totalorder %s191, %s194
    %p200 = scmp.eq.s32.totalorder %s25, 0
    %p201 = por %p199, %p200
    %p202 = scmp.ne.s32.totalorder %s191, %s194
    %p203 = scmp.eq.s32.totalorder %s30, 2
    %p204 = por %p202, %p203
    %p205 = scmp.ne.s32.totalorder %s194, %s195
    %p206 = scmp.eq.s32.totalorder %s30, 0
    %p207 = por %p205, %p206
    %p208 = scmp.ne.s32.totalorder %s194, %s195
    %p209 = scmp.eq.s32.totalorder %s31, 2
    %p210 = por %p208, %p209
    %p212 = scmp.ne.s32.totalorder %s195, %s211
    %p213 = scmp.eq.s32.totalorder %s31, 0
    %p214 = por %p212, %p213
    %s215 = ssub.s32 %s25, %s32
    %p216 = scmp.eq.s32.totalorder %s215, 0
    %s218 = sadd.s32 %s217, 1
    %s219 = scalar_select %p216, %s217, %s218
    %p222 = pneg %p216
    %p223 = scmp.eq.s32.totalorder %s25, 2
    %p224 = por %p222, %p223
    %p225 = scmp.ne.s32.totalorder %s217, %s220
    %p226 = scmp.eq.s32.totalorder %s25, 0
    %p227 = por %p225, %p226
    %p228 = scmp.ne.s32.totalorder %s217, %s220
    %p229 = scmp.eq.s32.totalorder %s30, 2
    %p230 = por %p228, %p229
    %p231 = scmp.ne.s32.totalorder %s220, %s221
    %p232 = scmp.eq.s32.totalorder %s30, 0
    %p233 = por %p231, %p232
    %p234 = scmp.ne.s32.totalorder %s220, %s221
    %p235 = scmp.eq.s32.totalorder %s31, 2
    %p236 = por %p234, %p235
    %p238 = scmp.ne.s32.totalorder %s221, %s237
    %p239 = scmp.eq.s32.totalorder %s31, 0
    %p240 = por %p238, %p239
    %s241 = ssub.s32 %s25, %s32
    %p242 = scmp.eq.s32.totalorder %s241, 0
    %s244 = sadd.s32 %s243, 1
    %s245 = scalar_select %p242, %s243, %s244
    %p248 = pneg %p242
    %p249 = scmp.eq.s32.totalorder %s25, 2
    %p250 = por %p248, %p249
    %p251 = scmp.ne.s32.totalorder %s243, %s246
    %p252 = scmp.eq.s32.totalorder %s25, 0
    %p253 = por %p251, %p252
    %p254 = scmp.ne.s32.totalorder %s243, %s246
    %p255 = scmp.eq.s32.totalorder %s30, 2
    %p256 = por %p254, %p255
    %p257 = scmp.ne.s32.totalorder %s246, %s247
    %p258 = scmp.eq.s32.totalorder %s30, 0
    %p259 = por %p257, %p258
    %p260 = scmp.ne.s32.totalorder %s246, %s247
    %p261 = scmp.eq.s32.totalorder %s31, 2
    %p262 = por %p260, %p261
    %p264 = scmp.ne.s32.totalorder %s247, %s263
    %p265 = scmp.eq.s32.totalorder %s31, 0
    %p266 = por %p264, %p265
    %s267 = ssub.s32 %s25, %s32
    %p268 = scmp.eq.s32.totalorder %s267, 0
    %s270 = sadd.s32 %s269, 1
    %s271 = scalar_select %p268, %s269, %s270
    %p274 = pneg %p268
    %p275 = scmp.eq.s32.totalorder %s25, 2
    %p276 = por %p274, %p275
    %p277 = scmp.ne.s32.totalorder %s269, %s272
    %p278 = scmp.eq.s32.totalorder %s25, 0
    %p279 = por %p277, %p278
    %p280 = scmp.ne.s32.totalorder %s269, %s272
    %p281 = scmp.eq.s32.totalorder %s30, 2
    %p282 = por %p280, %p281
    %p283 = scmp.ne.s32.totalorder %s272, %s273
    %p284 = scmp.eq.s32.totalorder %s30, 0
    %p285 = por %p283, %p284
    %p286 = scmp.ne.s32.totalorder %s272, %s273
    %p287 = scmp.eq.s32.totalorder %s31, 2
    %p288 = por %p286, %p287
    %p290 = scmp.ne.s32.totalorder %s273, %s289
    %p291 = scmp.eq.s32.totalorder %s31, 0
    %p292 = por %p290, %p291
    %s293 = ssub.s32 %s25, %s32
    %p294 = scmp.eq.s32.totalorder %s293, 0
    %s296 = sadd.s32 %s295, 1
    %s297 = scalar_select %p294, %s295, %s296
    %p300 = pneg %p294
    %p301 = scmp.eq.s32.totalorder %s25, 2
    %p302 = por %p300, %p301
    %p303 = scmp.ne.s32.totalorder %s295, %s298
    %p304 = scmp.eq.s32.totalorder %s25, 0
    %p305 = por %p303, %p304
    %p306 = scmp.ne.s32.totalorder %s295, %s298
    %p307 = scmp.eq.s32.totalorder %s30, 2
    %p308 = por %p306, %p307
    %p309 = scmp.ne.s32.totalorder %s298, %s299
    %p310 = scmp.eq.s32.totalorder %s30, 0
    %p311 = por %p309, %p310
    %p312 = scmp.ne.s32.totalorder %s298, %s299
    %p313 = scmp.eq.s32.totalorder %s31, 2
    %p314 = por %p312, %p313
    %p316 = scmp.ne.s32.totalorder %s299, %s315
    %p317 = scmp.eq.s32.totalorder %s31, 0
    %p318 = por %p316, %p317
    %p319 = scmp.le.s32.totalorder 1, %s25
    %p320 = scmp.lt.s32.totalorder %s25, 4
    %p321 = pnand %p319, %p320
    %p322 = pneg %p321
    // Predicated region
    $region9: #{pyramid_forward.2} parent=5 // pred_check
      _
    $region10: #{pyramid_forward.2} parent=5 // pred_check_branch
      %324 = sbr.rel (%p321) target = $region12
    $region11: #{pyramid_forward.2} parent=5 // pred_region
      %s325 = ssub.s32 %s25, 1
    $region12: #{pyramid_forward.2} parent=5 // pred_fallthru
      _
    %p326 = scmp.lt.s32.totalorder %s25, 3
    // Predicated region
    $region13: #{pyramid_forward.2} parent=5 // pred_check
      %p327 = pneg %p326
    $region14: #{pyramid_forward.2} parent=5 // pred_check_branch
      %329 = sbr.rel (%p327) target = $region16
    $region15: #{pyramid_forward.2} parent=5 // pred_region
      // Predicated region
      $region17: #{pyramid_forward.2} parent=15 // pred_check
        %p330 = pneg %p45
      $region18: #{pyramid_forward.2} parent=15 // pred_check_branch
        %332 = sbr.rel (%p330) target = $region20
      $region19: #{pyramid_forward.2} parent=15 // pred_region
        %p333 = scmp.lt.s32.totalorder %s25, 2
        %s334 = scalar_select %p333, %s25, 2
        %s335 = smul.addr %s334, 6
        %s336 = smul.addr %s335, 8
        %s337 = scalar_lea.vmem %s1, %s336
      $region20: #{pyramid_forward.2} parent=15 // pred_fallthru
        _
      // Predicated region
      $region21: #{pyramid_forward.2} parent=15 // pred_check
        %p338 = pneg %p71
      $region22: #{pyramid_forward.2} parent=15 // pred_check_branch
        %340 = sbr.rel (%p338) target = $region24
      $region23: #{pyramid_forward.2} parent=15 // pred_region
        %p341 = scmp.lt.s32.totalorder %s25, 2
        %s342 = scalar_select %p341, %s25, 2
        %s343 = smul.addr %s342, 6
        %s344 = smul.addr %s343, 8
        %s345 = scalar_lea.vmem %s2, %s344
      $region24: #{pyramid_forward.2} parent=15 // pred_fallthru
        _
      // Predicated region
      $region25: #{pyramid_forward.2} parent=15 // pred_check
        %p346 = pneg %p97
      $region26: #{pyramid_forward.2} parent=15 // pred_check_branch
        %348 = sbr.rel (%p346) target = $region28
      $region27: #{pyramid_forward.2} parent=15 // pred_region
        %p349 = scmp.lt.s32.totalorder %s25, 2
        %s350 = scalar_select %p349, %s25, 2
        %s351 = smul.addr %s350, 9
        %s352 = smul.addr %s351, 8
        %s353 = scalar_lea.vmem %s3, %s352
      $region28: #{pyramid_forward.2} parent=15 // pred_fallthru
        _
      // Predicated region
      $region29: #{pyramid_forward.2} parent=15 // pred_check
        %p354 = pneg %p123
      $region30: #{pyramid_forward.2} parent=15 // pred_check_branch
        %356 = sbr.rel (%p354) target = $region32
      $region31: #{pyramid_forward.2} parent=15 // pred_region
        %p357 = scmp.lt.s32.totalorder %s25, 2
        %s358 = scalar_select %p357, %s25, 2
        %s359 = smul.addr %s358, 3
        %s360 = scalar_lea.vmem %s4, %s359
      $region32: #{pyramid_forward.2} parent=15 // pred_fallthru
        _
      // Predicated region
      $region33: #{pyramid_forward.2} parent=15 // pred_check
        %p361 = pneg %p149
      $region34: #{pyramid_forward.2} parent=15 // pred_check_branch
        %363 = sbr.rel (%p361) target = $region36
      $region35: #{pyramid_forward.2} parent=15 // pred_region
        %p364 = scmp.lt.s32.totalorder %s25, 2
        %s365 = scalar_select %p364, %s25, 2
        %s366 = smul.addr %s365, 6
        %s367 = smul.addr %s366, 8
        %s368 = scalar_lea.vmem %s5, %s367
      $region36: #{pyramid_forward.2} parent=15 // pred_fallthru
        _
      // Predicated region
      $region37: #{pyramid_forward.2} parent=15 // pred_check
        %p369 = pneg %p175
      $region38: #{pyramid_forward.2} parent=15 // pred_check_branch
        %371 = sbr.rel (%p369) target = $region40
      $region39: #{pyramid_forward.2} parent=15 // pred_region
        %p372 = scmp.lt.s32.totalorder %s25, 2
        %s373 = scalar_select %p372, %s25, 2
        %s374 = smul.addr %s373, 3
        %s375 = scalar_lea.vmem %s6, %s374
      $region40: #{pyramid_forward.2} parent=15 // pred_fallthru
        _
      // Predicated region
      $region41: #{pyramid_forward.2} parent=15 // pred_check
        %p376 = pneg %p201
      $region42: #{pyramid_forward.2} parent=15 // pred_check_branch
        %378 = sbr.rel (%p376) target = $region44
      $region43: #{pyramid_forward.2} parent=15 // pred_region
        %p379 = scmp.lt.s32.totalorder %s25, 2
        %s380 = scalar_select %p379, %s25, 2
        %s381 = smul.addr %s380, 8
        %s382 = scalar_lea.vmem %s7, %s381
      $region44: #{pyramid_forward.2} parent=15 // pred_fallthru
        _
      // Predicated region
      $region45: #{pyramid_forward.2} parent=15 // pred_check
        %p383 = pneg %p227
      $region46: #{pyramid_forward.2} parent=15 // pred_check_branch
        %385 = sbr.rel (%p383) target = $region48
      $region47: #{pyramid_forward.2} parent=15 // pred_region
        %p386 = scmp.lt.s32.totalorder %s25, 2
        %s387 = scalar_select %p386, %s25, 2
        %s388 = scalar_lea.vmem %s8, %s387
      $region48: #{pyramid_forward.2} parent=15 // pred_fallthru
        _
      // Predicated region
      $region49: #{pyramid_forward.2} parent=15 // pred_check
        %p389 = pneg %p253
      $region50: #{pyramid_forward.2} parent=15 // pred_check_branch
        %391 = sbr.rel (%p389) target = $region52
      $region51: #{pyramid_forward.2} parent=15 // pred_region
        %p392 = scmp.lt.s32.totalorder %s25, 2
        %s393 = scalar_select %p392, %s25, 2
        %s394 = smul.addr %s393, 8
        %s395 = scalar_lea.vmem %s9, %s394
      $region52: #{pyramid_forward.2} parent=15 // pred_fallthru
        _
      // Predicated region
      $region53: #{pyramid_forward.2} parent=15 // pred_check
        %p396 = pneg %p279
      $region54: #{pyramid_forward.2} parent=15 // pred_check_branch
        %398 = sbr.rel (%p396) target = $region56
      $region55: #{pyramid_forward.2} parent=15 // pred_region
        %p399 = scmp.lt.s32.totalorder %s25, 2
        %s400 = scalar_select %p399, %s25, 2
        %s401 = scalar_lea.vmem %s10, %s400
      $region56: #{pyramid_forward.2} parent=15 // pred_fallthru
        _
    $region16: #{pyramid_forward.2} parent=5 // pred_fallthru
      _
    %p402 = scmp.le.s32.totalorder 1, %s25
    %p403 = scmp.lt.s32.totalorder %s25, 4
    %p404 = pnand %p402, %p403
    %p405 = pneg %p404
    // Predicated region
    $region57: #{pyramid_forward.2} parent=5 // pred_check
      _
    $region58: #{pyramid_forward.2} parent=5 // pred_check_branch
      %407 = sbr.rel (%p404) target = $region60
    $region59: #{pyramid_forward.2} parent=5 // pred_region
      %s408 = ssub.s32 %s25, 1
      %p409 = scmp.lt.s32.totalorder %s30, 2
      %s410 = scalar_select %p409, %s30, 2
      %s411 = smul.addr %s410, 6
      %s412 = smul.addr %s411, 8
      %s413 = scalar_lea.vmem %s1, %s412
      %p414 = pneg %p51
      %p415 = pneg %p48
      %p416 = scmp.lt.s32.totalorder %s30, 2
      %s417 = scalar_select %p416, %s30, 2
      %s418 = smul.addr %s417, 6
      %s419 = smul.addr %s418, 8
      %s420 = scalar_lea.vmem %s2, %s419
      %p421 = pneg %p77
      %p422 = pneg %p74
      %p423 = scmp.lt.s32.totalorder %s30, 2
      %s424 = scalar_select %p423, %s30, 2
      %s425 = smul.addr %s424, 9
      %s426 = smul.addr %s425, 8
      %s427 = scalar_lea.vmem %s3, %s426
      %p428 = pneg %p103
      %p429 = pneg %p100
      %p430 = scmp.lt.s32.totalorder %s30, 2
      %s431 = scalar_select %p430, %s30, 2
      %s432 = smul.addr %s431, 3
      %s433 = scalar_lea.vmem %s4, %s432
      %p434 = pneg %p129
      %p435 = pneg %p126
      %p436 = scmp.lt.s32.totalorder %s30, 2
      %s437 = scalar_select %p436, %s30, 2
      %s438 = smul.addr %s437, 6
      %s439 = smul.addr %s438, 8
      %s440 = scalar_lea.vmem %s5, %s439
      %p441 = pneg %p155
      %p442 = pneg %p152
      %p443 = scmp.lt.s32.totalorder %s30, 2
      %s444 = scalar_select %p443, %s30, 2
      %s445 = smul.addr %s444, 3
      %s446 = scalar_lea.vmem %s6, %s445
      %p447 = pneg %p181
      %p448 = pneg %p178
      %p449 = scmp.lt.s32.totalorder %s30, 2
      %s450 = scalar_select %p449, %s30, 2
      %s451 = smul.addr %s450, 8
      %s452 = scalar_lea.vmem %s7, %s451
      %p453 = pneg %p207
      %p454 = pneg %p204
      %p455 = scmp.lt.s32.totalorder %s30, 2
      %s456 = scalar_select %p455, %s30, 2
      %s457 = scalar_lea.vmem %s8, %s456
      %p458 = pneg %p233
      %p459 = pneg %p230
      %p460 = scmp.lt.s32.totalorder %s30, 2
      %s461 = scalar_select %p460, %s30, 2
      %s462 = smul.addr %s461, 8
      %s463 = scalar_lea.vmem %s9, %s462
      %p464 = pneg %p259
      %p465 = pneg %p256
      %p466 = scmp.lt.s32.totalorder %s30, 2
      %s467 = scalar_select %p466, %s30, 2
      %s468 = scalar_lea.vmem %s10, %s467
      %p469 = pneg %p285
      %p470 = pneg %p282
      %p471 = pneg %p311
      %p472 = pneg %p308
      %p473 = scmp.lt.s32.totalorder %s30, 2
      %s474 = scalar_select %p473, %s30, 2
      %s475 = smul.addr %s474, 2
      %s476 = smul.addr %s475, 8
      %s477 = scalar_lea.vmem %s11, %s476
      %p478 = scmp.lt.s32.totalorder %s30, 2
      %s479 = scalar_select %p478, %s30, 2
      %s480 = smul.addr %s479, 6
      %s481 = smul.addr %s480, 8
      %s482 = scalar_lea.vmem %s1, %s481
      %p483 = scmp.lt.s32.totalorder %s30, 2
      %s484 = scalar_select %p483, %s30, 2
      %s485 = smul.addr %s484, 6
      %s486 = smul.addr %s485, 8
      %s487 = scalar_lea.vmem %s2, %s486
      %p488 = scmp.lt.s32.totalorder %s30, 2
      %s489 = scalar_select %p488, %s30, 2
      %s490 = smul.addr %s489, 9
      %s491 = smul.addr %s490, 8
      %s492 = scalar_lea.vmem %s3, %s491
      %p493 = scmp.lt.s32.totalorder %s30, 2
      %s494 = scalar_select %p493, %s30, 2
      %s495 = smul.addr %s494, 3
      %s496 = scalar_lea.vmem %s4, %s495
      %p497 = scmp.lt.s32.totalorder %s30, 2
      %s498 = scalar_select %p497, %s30, 2
      %s499 = smul.addr %s498, 6
      %s500 = smul.addr %s499, 8
      %s501 = scalar_lea.vmem %s5, %s500
      %p502 = scmp.lt.s32.totalorder %s30, 2
      %s503 = scalar_select %p502, %s30, 2
      %s504 = smul.addr %s503, 3
      %s505 = scalar_lea.vmem %s6, %s504
      %p506 = scmp.lt.s32.totalorder %s30, 2
      %s507 = scalar_select %p506, %s30, 2
      %s508 = smul.addr %s507, 8
      %s509 = scalar_lea.vmem %s7, %s508
      %p510 = scmp.lt.s32.totalorder %s30, 2
      %s511 = scalar_select %p510, %s30, 2
      %s512 = scalar_lea.vmem %s8, %s511
      %p513 = scmp.lt.s32.totalorder %s30, 2
      %s514 = scalar_select %p513, %s30, 2
      %s515 = smul.addr %s514, 8
      %s516 = scalar_lea.vmem %s9, %s515
      %p517 = scmp.lt.s32.totalorder %s30, 2
      %s518 = scalar_select %p517, %s30, 2
      %s519 = scalar_lea.vmem %s10, %s518
      %p520 = scmp.lt.s32.totalorder %s30, 2
      %s521 = scalar_select %p520, %s30, 2
      %s522 = smul.addr %s521, 2
      %s523 = smul.addr %s522, 8
      %s524 = scalar_lea.vmem %s11, %s523
      %s525 = sld [smem:[#allocation3 + %s30]]
      %v526 = vld [vmem:[%s482] sm:$0xff]
      %v527 = vld [vmem:[%s482 + $0x8] sm:$0xff]
      %v528 = vld [vmem:[%s487] sm:$0xff]
      %v529 = vld [vmem:[%s487 + $0x8] sm:$0xff]
      %v530 = vld [vmem:[%s492] sm:$0xff]
      %v531 = vld [vmem:[%s492 + $0x8] sm:$0xff]
      %v532 = vld [vmem:[%s492 + $0x10] sm:$0x3f]
      %vm533 = vcmask 179200
      %v535 = vsel %vm533, %v526, 0
      %v538 = vsel %vm533, %v527, 0
      %vm540 = vcmask 1045504
      %v542 = vsel %vm540, %v532, 0
      %544 = vmatpush.msra.mxu0 0.0
      %545 = vmatpush.msra.mxu0 0.0
      %546 = vmatpush.msra.mxu0 0.0
      %547 = vmatpush.msra.mxu0 0.0
      %548 = vmatpush.msra.mxu0 0.0
      %549 = vmatpush.msra.mxu0 0.0
      %550 = vmatpush.msra.mxu0 0.0
      %551 = vmatpush.msra.mxu0 0.0
      %552 = vmatpush.msra.mxu0 0.0
      %553 = vmatpush.msra.mxu0 0.0
      %554 = vmatpush.msra.mxu0 0.0
      %555 = vmatpush.msra.mxu0 0.0
      %556 = vmatpush.msra.mxu0 0.0
      %557 = vmatpush.msra.mxu0 %v542
      %558 = vmatpush.msra.mxu0 %v531
      %559 = vmatpush.msra.mxu0 %v530
      %560 = vmatmul.f32.gmra.mxu0 %v535
      %v561 = vpop.f32.mrf.mxu0
      %v562 = vadd.f32 0.0, %v561
      %563 = vmatmul.f32.gmra.mxu0 %v538
      %v564 = vpop.f32.mrf.mxu0
      %v565 = vadd.f32 0.0, %v564
      %566 = vdwg.mxu0
      %v567 = vld [vmem:[%s496] sm:$0x1]
      %v569 = vperm.slane %v567, 0
      %vm571 = vcmask 130048
      %v573 = vsel %vm571, %v528, 0
      %v576 = vsel %vm571, %v529, 0
      %578 = vmatpush.msra.mxu0 0.0
      %579 = vmatpush.msra.mxu0 0.0
      %580 = vmatpush.msra.mxu0 0.0
      %581 = vmatpush.msra.mxu0 0.0
      %582 = vmatpush.msra.mxu0 0.0
      %583 = vmatpush.msra.mxu0 0.0
      %584 = vmatpush.msra.mxu0 0.0
      %585 = vmatpush.msra.mxu0 0.0
      %586 = vmatpush.msra.mxu0 0.0
      %587 = vmatpush.msra.mxu0 0.0
      %588 = vmatpush.msra.mxu0 0.0
      %589 = vmatpush.msra.mxu0 0.0
      %590 = vmatpush.msra.mxu0 0.0
      %591 = vmatpush.msra.mxu0 0.0
      %592 = vmatpush.msra.mxu0 %v565
      %593 = vmatpush.msra.mxu0 %v562
      %594 = vmatmul.f32.gmra.mxu0 %v573
      %v595 = vpop.f32.mrf.mxu0
      %v596 = vadd.f32 %v569, %v595
      %597 = vmatmul.f32.gmra.mxu0 %v576
      %v598 = vpop.f32.mrf.mxu0
      %v599 = vadd.f32 %v569, %v598
      %600 = vdwg.mxu0
      %v601 = vmax.f32 %v596, 0.0
      %v602 = vmax.f32 %v599, 0.0
      %v603 = vld [vmem:[%s501] sm:$0xff]
      %v604 = vld [vmem:[%s501 + $0x8] sm:$0xff]
      %v606 = vsel %vm571, %v601, 0
      %v609 = vsel %vm571, %v602, 0
      %611 = vmatpush.msra.mxu0 0.0
      %612 = vmatpush.msra.mxu0 0.0
      %613 = vmatpush.msra.mxu0 0.0
      %614 = vmatpush.msra.mxu0 0.0
      %615 = vmatpush.msra.mxu0 0.0
      %616 = vmatpush.msra.mxu0 0.0
      %617 = vmatpush.msra.mxu0 0.0
      %618 = vmatpush.msra.mxu0 0.0
      %619 = vmatpush.msra.mxu0 0.0
      %620 = vmatpush.msra.mxu0 0.0
      %621 = vmatpush.msra.mxu0 0.0
      %622 = vmatpush.msra.mxu0 0.0
      %623 = vmatpush.msra.mxu0 0.0
      %624 = vmatpush.msra.mxu0 0.0
      %625 = vmatpush.msra.mxu0 %v604
      %626 = vmatpush.msra.mxu0 %v603
      %627 = vmatmul.f32.gmra.mxu0 %v606
      %v628 = vpop.f32.mrf.mxu0
      %v629 = vadd.f32 0.0, %v628
      %630 = vmatmul.f32.gmra.mxu0 %v609
      %v631 = vpop.f32.mrf.mxu0
      %v632 = vadd.f32 0.0, %v631
      %633 = vdwg.mxu0
      %v634 = vld [vmem:[%s505] sm:$0x1]
      %v636 = vperm.slane %v634, 0
      %638 = vmatpush.msra.mxu0 0.0
      %639 = vmatpush.msra.mxu0 0.0
      %640 = vmatpush.msra.mxu0 0.0
      %641 = vmatpush.msra.mxu0 0.0
      %642 = vmatpush.msra.mxu0 0.0
      %643 = vmatpush.msra.mxu0 0.0
      %644 = vmatpush.msra.mxu0 0.0
      %645 = vmatpush.msra.mxu0 0.0
      %646 = vmatpush.msra.mxu0 0.0
      %647 = vmatpush.msra.mxu0 0.0
      %648 = vmatpush.msra.mxu0 0.0
      %649 = vmatpush.msra.mxu0 0.0
      %650 = vmatpush.msra.mxu0 0.0
      %651 = vmatpush.msra.mxu0 0.0
      %652 = vmatpush.msra.mxu0 %v632
      %653 = vmatpush.msra.mxu0 %v629
      %654 = vmatmul.f32.gmra.mxu0 %v573
      %v655 = vpop.f32.mrf.mxu0
      %v656 = vadd.f32 %v636, %v655
      %657 = vmatmul.f32.gmra.mxu0 %v576
      %v658 = vpop.f32.mrf.mxu0
      %v659 = vadd.f32 %v636, %v658
      %660 = vdwg.mxu0
      %s661 = scalar_lea.vmem %s482, 16
      %v662 = vld [vmem:[%s661] sm:$0xff]
      %v663 = vld [vmem:[%s661 + $0x8] sm:$0xff]
      %s664 = scalar_lea.vmem %s487, 16
      %v665 = vld [vmem:[%s664] sm:$0xff]
      %v666 = vld [vmem:[%s664 + $0x8] sm:$0xff]
      %s667 = scalar_lea.vmem %s492, 24
      %v668 = vld [vmem:[%s667] sm:$0xff]
      %v669 = vld [vmem:[%s667 + $0x8] sm:$0xff]
      %v670 = vld [vmem:[%s667 + $0x10] sm:$0x3f]
      %v672 = vsel %vm533, %v662, 0
      %v675 = vsel %vm533, %v663, 0
      %v678 = vsel %vm540, %v670, 0
      %680 = vmatpush.msra.mxu0 0.0
      %681 = vmatpush.msra.mxu0 0.0
      %682 = vmatpush.msra.mxu0 0.0
      %683 = vmatpush.msra.mxu0 0.0
      %684 = vmatpush.msra.mxu0 0.0
      %685 = vmatpush.msra.mxu0 0.0
      %686 = vmatpush.msra.mxu0 0.0
      %687 = vmatpush.msra.mxu0 0.0
      %688 = vmatpush.msra.mxu0 0.0
      %689 = vmatpush.msra.mxu0 0.0
      %690 = vmatpush.msra.mxu0 0.0
      %691 = vmatpush.msra.mxu0 0.0
      %692 = vmatpush.msra.mxu0 0.0
      %693 = vmatpush.msra.mxu0 %v678
      %694 = vmatpush.msra.mxu0 %v669
      %695 = vmatpush.msra.mxu0 %v668
      %696 = vmatmul.f32.gmra.mxu0 %v672
      %v697 = vpop.f32.mrf.mxu0
      %v698 = vadd.f32 0.0, %v697
      %699 = vmatmul.f32.gmra.mxu0 %v675
      %v700 = vpop.f32.mrf.mxu0
      %v701 = vadd.f32 0.0, %v700
      %702 = vdwg.mxu0
      %s703 = scalar_lea.vmem %s496, 1
      %v704 = vld [vmem:[%s703] sm:$0x1]
      %v706 = vperm.slane %v704, 0
      %v709 = vsel %vm571, %v665, 0
      %v712 = vsel %vm571, %v666, 0
      %714 = vmatpush.msra.mxu0 0.0
      %715 = vmatpush.msra.mxu0 0.0
      %716 = vmatpush.msra.mxu0 0.0
      %717 = vmatpush.msra.mxu0 0.0
      %718 = vmatpush.msra.mxu0 0.0
      %719 = vmatpush.msra.mxu0 0.0
      %720 = vmatpush.msra.mxu0 0.0
      %721 = vmatpush.msra.mxu0 0.0
      %722 = vmatpush.msra.mxu0 0.0
      %723 = vmatpush.msra.mxu0 0.0
      %724 = vmatpush.msra.mxu0 0.0
      %725 = vmatpush.msra.mxu0 0.0
      %726 = vmatpush.msra.mxu0 0.0
      %727 = vmatpush.msra.mxu0 0.0
      %728 = vmatpush.msra.mxu0 %v701
      %729 = vmatpush.msra.mxu0 %v698
      %730 = vmatmul.f32.gmra.mxu0 %v709
      %v731 = vpop.f32.mrf.mxu0
      %v732 = vadd.f32 %v706, %v731
      %733 = vmatmul.f32.gmra.mxu0 %v712
      %v734 = vpop.f32.mrf.mxu0
      %v735 = vadd.f32 %v706, %v734
      %736 = vdwg.mxu0
      %v737 = vmax.f32 %v732, 0.0
      %v738 = vmax.f32 %v735, 0.0
      %s739 = scalar_lea.vmem %s501, 16
      %v740 = vld [vmem:[%s739] sm:$0xff]
      %v741 = vld [vmem:[%s739 + $0x8] sm:$0xff]
      %v743 = vsel %vm571, %v737, 0
      %v746 = vsel %vm571, %v738, 0
      %748 = vmatpush.msra.mxu0 0.0
      %749 = vmatpush.msra.mxu0 0.0
      %750 = vmatpush.msra.mxu0 0.0
      %751 = vmatpush.msra.mxu0 0.0
      %752 = vmatpush.msra.mxu0 0.0
      %753 = vmatpush.msra.mxu0 0.0
      %754 = vmatpush.msra.mxu0 0.0
      %755 = vmatpush.msra.mxu0 0.0
      %756 = vmatpush.msra.mxu0 0.0
      %757 = vmatpush.msra.mxu0 0.0
      %758 = vmatpush.msra.mxu0 0.0
      %759 = vmatpush.msra.mxu0 0.0
      %760 = vmatpush.msra.mxu0 0.0
      %761 = vmatpush.msra.mxu0 0.0
      %762 = vmatpush.msra.mxu0 %v741
      %763 = vmatpush.msra.mxu0 %v740
      %764 = vmatmul.f32.gmra.mxu0 %v743
      %v765 = vpop.f32.mrf.mxu0
      %v766 = vadd.f32 0.0, %v765
      %767 = vmatmul.f32.gmra.mxu0 %v746
      %v768 = vpop.f32.mrf.mxu0
      %v769 = vadd.f32 0.0, %v768
      %770 = vdwg.mxu0
      %s771 = scalar_lea.vmem %s505, 1
      %v772 = vld [vmem:[%s771] sm:$0x1]
      %v774 = vperm.slane %v772, 0
      %776 = vmatpush.msra.mxu0 0.0
      %777 = vmatpush.msra.mxu0 0.0
      %778 = vmatpush.msra.mxu0 0.0
      %779 = vmatpush.msra.mxu0 0.0
      %780 = vmatpush.msra.mxu0 0.0
      %781 = vmatpush.msra.mxu0 0.0
      %782 = vmatpush.msra.mxu0 0.0
      %783 = vmatpush.msra.mxu0 0.0
      %784 = vmatpush.msra.mxu0 0.0
      %785 = vmatpush.msra.mxu0 0.0
      %786 = vmatpush.msra.mxu0 0.0
      %787 = vmatpush.msra.mxu0 0.0
      %788 = vmatpush.msra.mxu0 0.0
      %789 = vmatpush.msra.mxu0 0.0
      %790 = vmatpush.msra.mxu0 %v769
      %791 = vmatpush.msra.mxu0 %v766
      %792 = vmatmul.f32.gmra.mxu0 %v709
      %v793 = vpop.f32.mrf.mxu0
      %v794 = vadd.f32 %v774, %v793
      %795 = vmatmul.f32.gmra.mxu0 %v712
      %v796 = vpop.f32.mrf.mxu0
      %v797 = vadd.f32 %v774, %v796
      %798 = vdwg.mxu0
      %s799 = scalar_lea.vmem %s482, 32
      %v800 = vld [vmem:[%s799] sm:$0xff]
      %v801 = vld [vmem:[%s799 + $0x8] sm:$0xff]
      %s802 = scalar_lea.vmem %s487, 32
      %v803 = vld [vmem:[%s802] sm:$0xff]
      %v804 = vld [vmem:[%s802 + $0x8] sm:$0xff]
      %s805 = scalar_lea.vmem %s492, 48
      %v806 = vld [vmem:[%s805] sm:$0xff]
      %v807 = vld [vmem:[%s805 + $0x8] sm:$0xff]
      %v808 = vld [vmem:[%s805 + $0x10] sm:$0x3f]
      %v810 = vsel %vm533, %v800, 0
      %v813 = vsel %vm533, %v801, 0
      %v816 = vsel %vm540, %v808, 0
      %818 = vmatpush.msra.mxu0 0.0
      %819 = vmatpush.msra.mxu0 0.0
      %820 = vmatpush.msra.mxu0 0.0
      %821 = vmatpush.msra.mxu0 0.0
      %822 = vmatpush.msra.mxu0 0.0
      %823 = vmatpush.msra.mxu0 0.0
      %824 = vmatpush.msra.mxu0 0.0
      %825 = vmatpush.msra.mxu0 0.0
      %826 = vmatpush.msra.mxu0 0.0
      %827 = vmatpush.msra.mxu0 0.0
      %828 = vmatpush.msra.mxu0 0.0
      %829 = vmatpush.msra.mxu0 0.0
      %830 = vmatpush.msra.mxu0 0.0
      %831 = vmatpush.msra.mxu0 %v816
      %832 = vmatpush.msra.mxu0 %v807
      %833 = vmatpush.msra.mxu0 %v806
      %834 = vmatmul.f32.gmra.mxu0 %v810
      %v835 = vpop.f32.mrf.mxu0
      %v836 = vadd.f32 0.0, %v835
      %837 = vmatmul.f32.gmra.mxu0 %v813
      %v838 = vpop.f32.mrf.mxu0
      %v839 = vadd.f32 0.0, %v838
      %840 = vdwg.mxu0
      %s841 = scalar_lea.vmem %s496, 2
      %v842 = vld [vmem:[%s841] sm:$0x1]
      %v844 = vperm.slane %v842, 0
      %v847 = vsel %vm571, %v803, 0
      %v850 = vsel %vm571, %v804, 0
      %852 = vmatpush.msra.mxu0 0.0
      %853 = vmatpush.msra.mxu0 0.0
      %854 = vmatpush.msra.mxu0 0.0
      %855 = vmatpush.msra.mxu0 0.0
      %856 = vmatpush.msra.mxu0 0.0
      %857 = vmatpush.msra.mxu0 0.0
      %858 = vmatpush.msra.mxu0 0.0
      %859 = vmatpush.msra.mxu0 0.0
      %860 = vmatpush.msra.mxu0 0.0
      %861 = vmatpush.msra.mxu0 0.0
      %862 = vmatpush.msra.mxu0 0.0
      %863 = vmatpush.msra.mxu0 0.0
      %864 = vmatpush.msra.mxu0 0.0
      %865 = vmatpush.msra.mxu0 0.0
      %866 = vmatpush.msra.mxu0 %v839
      %867 = vmatpush.msra.mxu0 %v836
      %868 = vmatmul.f32.gmra.mxu0 %v847
      %v869 = vpop.f32.mrf.mxu0
      %v870 = vadd.f32 %v844, %v869
      %871 = vmatmul.f32.gmra.mxu0 %v850
      %v872 = vpop.f32.mrf.mxu0
      %v873 = vadd.f32 %v844, %v872
      %874 = vdwg.mxu0
      %v875 = vmax.f32 %v870, 0.0
      %v876 = vmax.f32 %v873, 0.0
      %s877 = scalar_lea.vmem %s501, 32
      %v878 = vld [vmem:[%s877] sm:$0xff]
      %v879 = vld [vmem:[%s877 + $0x8] sm:$0xff]
      %v881 = vsel %vm571, %v875, 0
      %v884 = vsel %vm571, %v876, 0
      %886 = vmatpush.msra.mxu0 0.0
      %887 = vmatpush.msra.mxu0 0.0
      %888 = vmatpush.msra.mxu0 0.0
      %889 = vmatpush.msra.mxu0 0.0
      %890 = vmatpush.msra.mxu0 0.0
      %891 = vmatpush.msra.mxu0 0.0
      %892 = vmatpush.msra.mxu0 0.0
      %893 = vmatpush.msra.mxu0 0.0
      %894 = vmatpush.msra.mxu0 0.0
      %895 = vmatpush.msra.mxu0 0.0
      %896 = vmatpush.msra.mxu0 0.0
      %897 = vmatpush.msra.mxu0 0.0
      %898 = vmatpush.msra.mxu0 0.0
      %899 = vmatpush.msra.mxu0 0.0
      %900 = vmatpush.msra.mxu0 %v879
      %901 = vmatpush.msra.mxu0 %v878
      %902 = vmatmul.f32.gmra.mxu0 %v881
      %v903 = vpop.f32.mrf.mxu0
      %v904 = vadd.f32 0.0, %v903
      %905 = vmatmul.f32.gmra.mxu0 %v884
      %v906 = vpop.f32.mrf.mxu0
      %v907 = vadd.f32 0.0, %v906
      %908 = vdwg.mxu0
      %s909 = scalar_lea.vmem %s505, 2
      %v910 = vld [vmem:[%s909] sm:$0x1]
      %v912 = vperm.slane %v910, 0
      %914 = vmatpush.msra.mxu0 0.0
      %915 = vmatpush.msra.mxu0 0.0
      %916 = vmatpush.msra.mxu0 0.0
      %917 = vmatpush.msra.mxu0 0.0
      %918 = vmatpush.msra.mxu0 0.0
      %919 = vmatpush.msra.mxu0 0.0
      %920 = vmatpush.msra.mxu0 0.0
      %921 = vmatpush.msra.mxu0 0.0
      %922 = vmatpush.msra.mxu0 0.0
      %923 = vmatpush.msra.mxu0 0.0
      %924 = vmatpush.msra.mxu0 0.0
      %925 = vmatpush.msra.mxu0 0.0
      %926 = vmatpush.msra.mxu0 0.0
      %927 = vmatpush.msra.mxu0 0.0
      %928 = vmatpush.msra.mxu0 %v907
      %929 = vmatpush.msra.mxu0 %v904
      %930 = vmatmul.f32.gmra.mxu0 %v847
      %v931 = vpop.f32.mrf.mxu0
      %v932 = vadd.f32 %v912, %v931
      %933 = vmatmul.f32.gmra.mxu0 %v850
      %v934 = vpop.f32.mrf.mxu0
      %v935 = vadd.f32 %v912, %v934
      %936 = vdwg.mxu0
      %v937 = vld [vmem:[%s509] sm:$0xff]
      %v938 = vld [vmem:[%s512] sm:$0x1]
      %vm939 = vcmask 64512
      %v941 = vsel %vm939, 0.0, 0
      %943 = vmatpush.msra.mxu0 0.0
      %944 = vmatpush.msra.mxu0 0.0
      %945 = vmatpush.msra.mxu0 0.0
      %946 = vmatpush.msra.mxu0 0.0
      %947 = vmatpush.msra.mxu0 0.0
      %948 = vmatpush.msra.mxu0 0.0
      %949 = vmatpush.msra.mxu0 0.0
      %950 = vmatpush.msra.mxu0 0.0
      %951 = vmatpush.msra.mxu0 0.0
      %952 = vmatpush.msra.mxu0 0.0
      %953 = vmatpush.msra.mxu0 0.0
      %954 = vmatpush.msra.mxu0 0.0
      %955 = vmatpush.msra.mxu0 0.0
      %956 = vmatpush.msra.mxu0 0.0
      %957 = vmatpush.msra.mxu0 0.0
      %958 = vmatpush.msra.mxu0 %v937
      %959 = vmatmul.f32.gmra.mxu0 %v941
      %v960 = vpop.f32.mrf.mxu0
      %v961 = vadd.f32 0.0, %v960
      %962 = vmatmul.f32.gmra.mxu0 %v941
      %v963 = vpop.f32.mrf.mxu0
      %v964 = vadd.f32 0.0, %v963
      %965 = vdwg.mxu0
      %v966 = vadd.f32 %v656, %v961
      %v967 = vadd.f32 %v659, %v964
      %v969 = vperm.slane %v938, 0
      %v971 = vadd.f32 %v966, %v969
      %v972 = vadd.f32 %v967, %v969
      %v973 = vtanh.pop %v971
      %v974 = vtanh.pop %v972
      %v976 = vsel %vm939, %v973, 0
      %v979 = vsel %vm939, %v974, 0
      %981 = vmatpush.msra.mxu0 0.0
      %982 = vmatpush.msra.mxu0 0.0
      %983 = vmatpush.msra.mxu0 0.0
      %984 = vmatpush.msra.mxu0 0.0
      %985 = vmatpush.msra.mxu0 0.0
      %986 = vmatpush.msra.mxu0 0.0
      %987 = vmatpush.msra.mxu0 0.0
      %988 = vmatpush.msra.mxu0 0.0
      %989 = vmatpush.msra.mxu0 0.0
      %990 = vmatpush.msra.mxu0 0.0
      %991 = vmatpush.msra.mxu0 0.0
      %992 = vmatpush.msra.mxu0 0.0
      %993 = vmatpush.msra.mxu0 0.0
      %994 = vmatpush.msra.mxu0 0.0
      %995 = vmatpush.msra.mxu0 0.0
      %996 = vmatpush.msra.mxu0 %v937
      %997 = vmatmul.f32.gmra.mxu0 %v976
      %v998 = vpop.f32.mrf.mxu0
      %v999 = vadd.f32 0.0, %v998
      %1000 = vmatmul.f32.gmra.mxu0 %v979
      %v1001 = vpop.f32.mrf.mxu0
      %v1002 = vadd.f32 0.0, %v1001
      %1003 = vdwg.mxu0
      %v1004 = vadd.f32 %v794, %v999
      %v1005 = vadd.f32 %v797, %v1002
      %v1006 = vadd.f32 %v1004, %v969
      %v1007 = vadd.f32 %v1005, %v969
      %v1008 = vtanh.pop %v1006
      %v1009 = vtanh.pop %v1007
      %v1011 = vsel %vm939, %v1008, 0
      %v1014 = vsel %vm939, %v1009, 0
      %1016 = vmatpush.msra.mxu0 0.0
      %1017 = vmatpush.msra.mxu0 0.0
      %1018 = vmatpush.msra.mxu0 0.0
      %1019 = vmatpush.msra.mxu0 0.0
      %1020 = vmatpush.msra.mxu0 0.0
      %1021 = vmatpush.msra.mxu0 0.0
      %1022 = vmatpush.msra.mxu0 0.0
      %1023 = vmatpush.msra.mxu0 0.0
      %1024 = vmatpush.msra.mxu0 0.0
      %1025 = vmatpush.msra.mxu0 0.0
      %1026 = vmatpush.msra.mxu0 0.0
      %1027 = vmatpush.msra.mxu0 0.0
      %1028 = vmatpush.msra.mxu0 0.0
      %1029 = vmatpush.msra.mxu0 0.0
      %1030 = vmatpush.msra.mxu0 0.0
      %1031 = vmatpush.msra.mxu0 %v937
      %1032 = vmatmul.f32.gmra.mxu0 %v1011
      %v1033 = vpop.f32.mrf.mxu0
      %v1034 = vadd.f32 0.0, %v1033
      %1035 = vmatmul.f32.gmra.mxu0 %v1014
      %v1036 = vpop.f32.mrf.mxu0
      %v1037 = vadd.f32 0.0, %v1036
      %1038 = vdwg.mxu0
      %v1039 = vadd.f32 %v932, %v1034
      %v1040 = vadd.f32 %v935, %v1037
      %v1041 = vadd.f32 %v1039, %v969
      %v1042 = vadd.f32 %v1040, %v969
      %v1043 = vtanh.pop %v1041
      %v1044 = vtanh.pop %v1042
      %v1045 = vtanh.pop %v973
      %v1046 = vtanh.pop %v974
      %v1047 = vtanh.pop %v1008
      %v1048 = vtanh.pop %v1009
      %v1049 = vtanh.pop %v1043
      %v1050 = vtanh.pop %v1044
      %v1051 = vld [vmem:[%s516] sm:$0xff]
      %v1052 = vld [vmem:[%s519] sm:$0x1]
      %v1054 = vperm.slane %v1052, 0
      %v1057 = vsel %vm939, %v1045, 0
      %v1060 = vsel %vm939, %v1046, 0
      %v1063 = vsel %vm939, %v1047, 0
      %v1066 = vsel %vm939, %v1048, 0
      %v1069 = vsel %vm939, %v1049, 0
      %v1072 = vsel %vm939, %v1050, 0
      %1074 = vmatpush.msra.mxu0 0.0
      %1075 = vmatpush.msra.mxu0 0.0
      %1076 = vmatpush.msra.mxu0 0.0
      %1077 = vmatpush.msra.mxu0 0.0
      %1078 = vmatpush.msra.mxu0 0.0
      %1079 = vmatpush.msra.mxu0 0.0
      %1080 = vmatpush.msra.mxu0 0.0
      %1081 = vmatpush.msra.mxu0 0.0
      %1082 = vmatpush.msra.mxu0 0.0
      %1083 = vmatpush.msra.mxu0 0.0
      %1084 = vmatpush.msra.mxu0 0.0
      %1085 = vmatpush.msra.mxu0 0.0
      %1086 = vmatpush.msra.mxu0 0.0
      %1087 = vmatpush.msra.mxu0 0.0
      %1088 = vmatpush.msra.mxu0 0.0
      %1089 = vmatpush.msra.mxu0 %v1051
      %1090 = vmatmul.f32.gmra.mxu0 %v1057
      %v1091 = vpop.f32.mrf.mxu0
      %v1092 = vadd.f32 %v1054, %v1091
      %1093 = vmatmul.f32.gmra.mxu0 %v1060
      %v1094 = vpop.f32.mrf.mxu0
      %v1095 = vadd.f32 %v1054, %v1094
      %1096 = vmatmul.f32.gmra.mxu0 %v1063
      %v1097 = vpop.f32.mrf.mxu0
      %v1098 = vadd.f32 %v1054, %v1097
      %1099 = vmatmul.f32.gmra.mxu0 %v1066
      %v1100 = vpop.f32.mrf.mxu0
      %v1101 = vadd.f32 %v1054, %v1100
      %1102 = vmatmul.f32.gmra.mxu0 %v1069
      %v1103 = vpop.f32.mrf.mxu0
      %v1104 = vadd.f32 %v1054, %v1103
      %1105 = vmatmul.f32.gmra.mxu0 %v1072
      %v1106 = vpop.f32.mrf.mxu0
      %v1107 = vadd.f32 %v1054, %v1106
      %1108 = vdwg.mxu0
      %v1109 = vlaneseq
      %v1110 = vshrl.u32 %v1109, 7
      %v1111 = vadd.s32 %v1110, 8
      %v1112 = vadd.s32 %v1110, 16
      %v1113 = vadd.s32 %v1110, 24
      %v1114 = vadd.s32 %v1110, 32
      %v1115 = vadd.s32 %v1110, 40
      %s1116 = smul.u32 %s525, 16
      %v1117 = vstv %s1116
      %vm1118 = vcmp.lt.s32.totalorder %v1110, %v1117
      %vm1119 = vcmp.lt.s32.totalorder %v1111, %v1117
      %vm1120 = vcmp.lt.s32.totalorder %v1112, %v1117
      %vm1121 = vcmp.lt.s32.totalorder %v1113, %v1117
      %vm1122 = vcmp.lt.s32.totalorder %v1114, %v1117
      %vm1123 = vcmp.lt.s32.totalorder %v1115, %v1117
      %v1124 = vsel %vm1118, %v1092, -1e+30
      %v1125 = vsel %vm1119, %v1095, -1e+30
      %v1126 = vsel %vm1120, %v1098, -1e+30
      %v1127 = vsel %vm1121, %v1101, -1e+30
      %v1128 = vsel %vm1122, %v1104, -1e+30
      %v1129 = vsel %vm1123, %v1107, -1e+30
      %v1130 = vmax.f32 %v1124, %v1126
      %v1131 = vmax.f32 %v1125, %v1127
      %v1132 = vmax.f32 %v1130, %v1128
      %v1133 = vmax.f32 %v1131, %v1129
      %v1134 = vsub.f32 %v1124, %v1132
      %v1135 = vsub.f32 %v1125, %v1133
      %v1136 = vmul.f32 %v1134, 1.442695
      %v1137 = vpow.pop %v1136
      %v1138 = vmul.f32 %v1135, 1.442695
      %v1139 = vpow.pop %v1138
      %v1140 = vsub.f32 %v1126, %v1132
      %v1141 = vsub.f32 %v1127, %v1133
      %v1142 = vmul.f32 %v1140, 1.442695
      %v1143 = vpow.pop %v1142
      %v1144 = vmul.f32 %v1141, 1.442695
      %v1145 = vpow.pop %v1144
      %v1146 = vsub.f32 %v1128, %v1132
      %v1147 = vsub.f32 %v1129, %v1133
      %v1148 = vmul.f32 %v1146, 1.442695
      %v1149 = vpow.pop %v1148
      %v1150 = vmul.f32 %v1147, 1.442695
      %v1151 = vpow.pop %v1150
      %v1152 = vadd.f32 %v1137, %v1143
      %v1153 = vadd.f32 %v1139, %v1145
      %v1154 = vadd.f32 %v1152, %v1149
      %v1155 = vadd.f32 %v1153, %v1151
      %v1156 = vrcp.pop %v1154
      %v1157 = vmul.f32 %v1154, %v1156
      %v1158 = vsub.f32 1.0, %v1157
      %v1159 = vmul.f32 %v1156, %v1158
      %v1160 = vadd.f32 %v1156, %v1159
      %vm1161 = vweird.f32 %v1154
      %vm1162 = vweird.f32 %v1156
      %vm1163 = vmor %vm1161, %vm1162
      %v1164 = vsel %vm1163, %v1156, %v1160
      %v1165 = vand.u32 2147483647, %v1154
      %vm1166 = vcmp.eq.f32.partialorder %v1165, 8.507059e+37
      %v1167 = vand.u32 %v1154, 2147483648
      %v1168 = vor.u32 1.1754944e-38, %v1167
      %v1169 = vsel %vm1166, %v1168, %v1164
      %v1170 = vmul.f32 1.0, %v1169
      %v1171 = vrcp.pop %v1155
      %v1172 = vmul.f32 %v1155, %v1171
      %v1173 = vsub.f32 1.0, %v1172
      %v1174 = vmul.f32 %v1171, %v1173
      %v1175 = vadd.f32 %v1171, %v1174
      %vm1176 = vweird.f32 %v1155
      %vm1177 = vweird.f32 %v1171
      %vm1178 = vmor %vm1176, %vm1177
      %v1179 = vsel %vm1178, %v1171, %v1175
      %v1180 = vand.u32 2147483647, %v1155
      %vm1181 = vcmp.eq.f32.partialorder %v1180, 8.507059e+37
      %v1182 = vand.u32 %v1155, 2147483648
      %v1183 = vor.u32 1.1754944e-38, %v1182
      %v1184 = vsel %vm1181, %v1183, %v1179
      %v1185 = vmul.f32 1.0, %v1184
      %v1186 = vmul.f32 %v1137, %v1170
      %v1187 = vmul.f32 %v1139, %v1185
      %1189 = vset.pattern.permute.xlu0 0
      %1190 = vperm.xlu0 %1189, %v1186
      %v1191 = vpop.permute.xlu0 %1190
      %1194 = vset.pattern.permute.xlu0 0
      %1195 = vperm.xlu0 %1194, %v1187
      %v1196 = vpop.permute.xlu0 %1195
      %v1198 = vmul.f32 %v1191, %v973
      %v1199 = vmul.f32 %v1196, %v974
      %v1200 = vmul.f32 %v1143, %v1170
      %v1201 = vmul.f32 %v1145, %v1185
      %1203 = vset.pattern.permute.xlu0 0
      %1204 = vperm.xlu0 %1203, %v1200
      %v1205 = vpop.permute.xlu0 %1204
      %1208 = vset.pattern.permute.xlu0 0
      %1209 = vperm.xlu0 %1208, %v1201
      %v1210 = vpop.permute.xlu0 %1209
      %v1212 = vmul.f32 %v1205, %v1008
      %v1213 = vmul.f32 %v1210, %v1009
      %v1214 = vadd.f32 %v1198, %v1212
      %v1215 = vadd.f32 %v1199, %v1213
      %v1216 = vmul.f32 %v1149, %v1170
      %v1217 = vmul.f32 %v1151, %v1185
      %1219 = vset.pattern.permute.xlu0 0
      %1220 = vperm.xlu0 %1219, %v1216
      %v1221 = vpop.permute.xlu0 %1220
      %1224 = vset.pattern.permute.xlu0 0
      %1225 = vperm.xlu0 %1224, %v1217
      %v1226 = vpop.permute.xlu0 %1225
      %v1228 = vmul.f32 %v1221, %v1043
      %v1229 = vmul.f32 %v1226, %v1044
      %v1230 = vadd.f32 %v1214, %v1228
      %v1231 = vadd.f32 %v1215, %v1229
      %1232 = vst.msk [vmem:[%s524] sm:$0xff] %vm939, %v1230
      %1233 = vst.msk [vmem:[%s524 + $0x8] sm:$0xff] %vm939, %v1231
      %p1234 = scmp.lt.s32.totalorder %s30, 2
      %s1235 = scalar_select %p1234, %s30, 2
      %s1236 = smul.addr %s1235, 2
      %s1237 = smul.addr %s1236, 8
      %s1238 = scalar_lea.vmem %s11, %s1237
      // Predicated region
      $region61: #{pyramid_forward.2} parent=59 // pred_check
        %p1239 = pneg %p308
      $region62: #{pyramid_forward.2} parent=59 // pred_check_branch
        %1241 = sbr.rel (%p1239) target = $region64
      $region63: #{pyramid_forward.2} parent=59 // pred_region
        _
      $region64: #{pyramid_forward.2} parent=59 // pred_fallthru
        _
    $region60: #{pyramid_forward.2} parent=5 // pred_fallthru
      _
    %p1242 = scmp.le.s32.totalorder 2, %s25
    // Predicated region
    $region65: #{pyramid_forward.2} parent=5 // pred_check
      %p1243 = pneg %p1242
    $region66: #{pyramid_forward.2} parent=5 // pred_check_branch
      %1245 = sbr.rel (%p1243) target = $region68
    $region67: #{pyramid_forward.2} parent=5 // pred_region
      %s1246 = ssub.s32 %s25, 2
      // Predicated region
      $region69: #{pyramid_forward.2} parent=67 // pred_check
        %p1247 = pneg %p314
      $region70: #{pyramid_forward.2} parent=67 // pred_check_branch
        %1249 = sbr.rel (%p1247) target = $region72
      $region71: #{pyramid_forward.2} parent=67 // pred_region
        %p1250 = scmp.lt.s32.totalorder %s31, 2
        %s1251 = scalar_select %p1250, %s31, 2
        %s1252 = smul.addr %s1251, 2
        %s1253 = smul.addr %s1252, 8
        %s1254 = scalar_lea.vmem %s11, %s1253
      $region72: #{pyramid_forward.2} parent=67 // pred_fallthru
        _
    $region68: #{pyramid_forward.2} parent=5 // pred_fallthru
      _
  $region6: #{pyramid_forward.2} parent=0 // loop_footer
    %s29 = sadd.s32 1, %s25
  $region7: #{pyramid_forward.2} parent=0 // loop_footer_branch
    %24 = sbr.rel target = $region3
  $region8: #{pyramid_forward.2} parent=0 // loop_exit
    _

</llo_original>
